<compile_context>
chip_gen: v7x
topology: tpu7x:2x2x1
jax: 0.10.0
libtpu: 0.0.40
codegen_flags: <defaults>
</compile_context>

<pallas_src>
import functools
import math

import jax
import jax.numpy as jnp
from jax.experimental import pallas as pl
from jax.experimental.pallas import tpu as pltpu


def _vmem_limit_bytes():
    """Generation-aware VMEM budget: 3/4 of physical, capped at 100 MiB."""
    try:
        cap = int(pltpu.get_tpu_info().vmem_capacity_bytes)
    except Exception:
        cap = 64 * 1024 * 1024  # conservative fallback: fits every generation (v7x = 64 MiB)
    return min(int(cap * 3 // 4), 100 * 1024 * 1024)


def _row_attn_kernel(x_ref, wq_ref, wk_ref, wv_ref, wo_ref,
                     out_ref, attn_ref, cum_ref, *,
                     num_heads, head_dim, lq, compute_dtype, approx_recip):
    H, D = num_heads, head_dim
    qi = pl.program_id(1)          # query tile index ("parallel")
    r = pl.program_id(2)           # MSA row index (sequential carry, "arbitrary")

    L = x_ref.shape[2]
    cd = compute_dtype

    x2 = x_ref[0, 0]                                   # (L, E) — one (row, batch) slice
    if lq == L:
        xq = x2
    else:
        q_start = pl.multiple_of(qi * lq, lq)
        xq = x_ref[0, 0, pl.ds(q_start, lq), :]        # (Lq, E) query slice

    # Projections: plain 2-D MXU matmuls (weights pre-transposed, Wq pre-scaled; bf16 in fast mode).
    q2 = jnp.dot(xq, wq_ref[...], preferred_element_type=jnp.float32)   # (Lq, E) f32
    k2 = jnp.dot(x2, wk_ref[...], preferred_element_type=jnp.float32)   # (L,  E) f32
    v2 = jnp.dot(x2, wv_ref[...], preferred_element_type=jnp.float32)   # (L,  E) f32

    # Head split: reshape + one layout-aware transpose (no per-head stack/concat copies).
    qh = pltpu.einshape('qhd->hqd', q2.astype(cd).reshape(lq, H, D))    # (H, Lq, D)
    kh = pltpu.einshape('khd->hkd', k2.astype(cd).reshape(L, H, D))     # (H, L,  D)
    vh = pltpu.einshape('khd->hkd', v2.astype(cd).reshape(L, H, D))     # (H, L,  D)

    # Raw logits for this row / query tile: head-batched MXU matmul, f32 accumulation.
    s = jnp.einsum('hqd,hkd->hqk', qh, kh,
                   preferred_element_type=jnp.float32)                  # (H, Lq, L)

    # row_causal_mask: running mean over rows, carried in VMEM scratch, reset at r == 0.
    @pl.when(r == 0)
    def _():
        cum_ref[...] = jnp.zeros_like(cum_ref)

    new_cum = cum_ref[...] + s          # fused carry update: single accumulator read per step
    cum_ref[...] = new_cum
    inv_r = 1.0 / (r + 1).astype(jnp.float32)
    w = new_cum * inv_r                                                 # (H, Lq, L) f32

    # Numerically-stable softmax over keys (kept in f32).
    w_max = jnp.max(w, axis=-1, keepdims=True)
    e = jnp.exp(w - w_max)
    denom = jnp.sum(e, axis=-1, keepdims=True)
    if approx_recip:
        p = e * pl.reciprocal(denom, approx=True)    # EUP reciprocal + VPU multiply
    else:
        p = e / denom                                # exact divide (precise mode)

    # attn_probs stored directly in the PyTorch (R, H, N, L, L) layout.
    attn_ref[0, :, 0, :, :] = p.astype(attn_ref.dtype)

    # Context + output projection: Wo folded per-head as (H, D, E); sum heads (no concat copy).
    ctx = jnp.einsum('hqk,hkd->hqd', p.astype(cd), vh,
                     preferred_element_type=jnp.float32)                # (H, Lq, D)
    out_h = jnp.einsum('hqd,hde->hqe', ctx.astype(cd), wo_ref[...],
                       preferred_element_type=jnp.float32)              # (H, Lq, E)
    out_ref[0, 0] = jnp.sum(out_h, axis=0).astype(out_ref.dtype)        # (Lq, E)


def row_self_attention(x, wq, wk, wv, wo, num_heads, *,
                       lq=None, precise=False, attn_dtype=jnp.float32):
    """x: (R, L, N, E) float32 (PyTorch convention); weights (E, E) as in nn.Linear (y = x @ W^T).
    Returns (output, attn_probs) with shapes (R, L, N, E) and (R, H, N, L, L).
    precise=True: all-f32 math + exact divide (bit-for-bit-ish parity with the module).
    precise=False: bf16 MXU operands (f32 accumulation) + approx-reciprocal softmax (fast path)."""
    R, L, N, E = x.shape
    H = num_heads
    D = E // H
    scaling = (D ** -0.5) / math.sqrt(R)     # align_scaling(q)

    # Query-tile size: full L when small, else 256-wide tiles.
    if lq is None:
        lq = L if L <= 256 else 256
    if lq != L and (L % lq != 0 or lq % 8 != 0):
        lq = L   # TODO(synk): pad / ragged handling when L is not divisible by the query tile.
    n_q = L // lq

    compute_dtype = jnp.float32 if precise else jnp.bfloat16

    # One-time weight prep: transpose for y = x @ W^T, fold scaling into Wq, per-head Wo, cast.
    wq_t = (wq.T * jnp.float32(scaling)).astype(compute_dtype)
    wk_t = wk.T.astype(compute_dtype)
    wv_t = wv.T.astype(compute_dtype)
    wo3 = wo.T.reshape(H, D, E).astype(compute_dtype)     # (H, D, E): per-head output projection

    # Kernel-side layout (R, N, L, E): per-(row, batch) blocks are full, lane-dense (L, E) tiles.
    x_k = jnp.transpose(x, (0, 2, 1, 3)).astype(compute_dtype)

    kernel = functools.partial(_row_attn_kernel, num_heads=H, head_dim=D, lq=lq,
                               compute_dtype=compute_dtype, approx_recip=not precise)

    weight_spec = lambda shape: pl.BlockSpec(
        shape, lambda n, q, r: (0,) * len(shape), pipeline_mode=pl.Buffered(1))

    out_k, attn_probs = pl.pallas_call(
        kernel,
        out_shape=(
            jax.ShapeDtypeStruct((R, N, L, E), jnp.float32),
            jax.ShapeDtypeStruct((R, H, N, L, L), attn_dtype),   # PyTorch 'rhnij' layout
        ),
        grid_spec=pltpu.PrefetchScalarGridSpec(
            num_scalar_prefetch=0,
            grid=(N, n_q, R),                                    # R innermost: sequential carry
            in_specs=[
                pl.BlockSpec((1, 1, L, E), lambda n, q, r: (r, n, 0, 0)),   # x
                weight_spec((E, E)),                                        # Wq^T * scaling
                weight_spec((E, E)),                                        # Wk^T
                weight_spec((E, E)),                                        # Wv^T
                weight_spec((H, D, E)),                                     # Wo^T as (H, D, E)
            ],
            out_specs=[
                pl.BlockSpec((1, 1, lq, E), lambda n, q, r: (r, n, q, 0)),        # output
                pl.BlockSpec((1, H, 1, lq, L), lambda n, q, r: (r, 0, n, q, 0)),  # attn_probs
            ],
            scratch_shapes=[pltpu.VMEM((H, lq, L), jnp.float32)],  # per-query-tile running logit sum
        ),
        compiler_params=pltpu.CompilerParams(
            dimension_semantics=("parallel", "parallel", "arbitrary"),
            vmem_limit_bytes=_vmem_limit_bytes(),
        ),
    )(x_k, wq_t, wk_t, wv_t, wo3)

    # attn_probs already matches the module layout; only the (much smaller) output is re-ordered.
    output = jnp.transpose(out_k, (0, 2, 1, 3))                   # (R, L, N, E)
    return output, attn_probs


def _reference(x, wq, wk, wv, wo, num_heads):
    """Pure-JAX re-implementation of RowSelfAttention.forward (eval, no masks/rope)."""
    R, L, N, E = x.shape
    H = num_heads
    D = E // H
    scaling = (D ** -0.5) / math.sqrt(R)
    hi = jax.lax.Precision.HIGHEST
    q = (jnp.einsum('rlne,fe->rlnf', x, wq, precision=hi) * scaling).reshape(R, L, N, H, D)
    k = jnp.einsum('rlne,fe->rlnf', x, wk, precision=hi).reshape(R, L, N, H, D)
    v = jnp.einsum('rlne,fe->rlnf', x, wv, precision=hi).reshape(R, L, N, H, D)
    raw = jnp.einsum('rinhd,rjnhd->rhnij', q, k, precision=hi)
    denom = jnp.arange(1, R + 1, dtype=jnp.float32).reshape(R, 1, 1, 1, 1)
    w = jnp.cumsum(raw, axis=0) / denom                           # row_causal_mask
    p = jax.nn.softmax(w, axis=-1)
    ctx = jnp.einsum('rhnij,rjnhd->rinhd', p, v, precision=hi).reshape(R, L, N, E)
    out = jnp.einsum('rlne,fe->rlnf', ctx, wo, precision=hi)
    return out, p


if __name__ == "__main__":
    # Small shapes: R rows, L cols, N batch, E embed, H heads.
    R, L, N, E, H = 4, 16, 2, 32, 4

    key = jax.random.PRNGKey(0)
    kx, k1, k2, k3, k4 = jax.random.split(key, 5)
    x = jax.random.normal(kx, (R, L, N, E), dtype=jnp.float32)
    scale = 1.0 / math.sqrt(E)
    wq = jax.random.uniform(k1, (E, E), jnp.float32, -scale, scale)
    wk = jax.random.uniform(k2, (E, E), jnp.float32, -scale, scale)
    wv = jax.random.uniform(k3, (E, E), jnp.float32, -scale, scale)
    wo = jax.random.uniform(k4, (E, E), jnp.float32, -scale, scale)

    out_ref, attn_ref = _reference(x, wq, wk, wv, wo, num_heads=H)

    # 1) precise path (all f32, exact divide): tight parity with the PyTorch module.
    out_p, attn_p = row_self_attention(x, wq, wk, wv, wo, num_heads=H, precise=True)
    jax.block_until_ready((out_p, attn_p))
    assert out_p.shape == (R, L, N, E)
    assert attn_p.shape == (R, H, N, L, L)
    assert jnp.allclose(out_p, out_ref, atol=1e-4, rtol=1e-4), \
        float(jnp.max(jnp.abs(out_p - out_ref)))
    assert jnp.allclose(attn_p, attn_ref, atol=1e-4, rtol=1e-4), \
        float(jnp.max(jnp.abs(attn_p - attn_ref)))

    # 2) fast path (bf16 MXU operands, f32 accumulation/softmax, approx reciprocal): looser check.
    out_f, attn_f = row_self_attention(x, wq, wk, wv, wo, num_heads=H, precise=False)
    jax.block_until_ready((out_f, attn_f))
    assert jnp.allclose(out_f, out_ref, atol=2e-2, rtol=2e-2), \
        float(jnp.max(jnp.abs(out_f - out_ref)))
    assert jnp.allclose(attn_f, attn_ref, atol=2e-2, rtol=2e-2), \
        float(jnp.max(jnp.abs(attn_f - attn_ref)))

    # TODO(synk): dropout_module is identity (p=0 / eval); attention/padding masks and RoPE
    #             (add_rope=False) are not exercised in this forward and are not implemented.
    print("KERNEL_OK")
</pallas_src>

<mosaic_0001>
module attributes {stable_mosaic.version = 11 : i64} {
  func.func @_row_attn_kernel(%arg0: i32, %arg1: i32, %arg2: i32, %arg3: memref<1x1x16x32xf32, #tpu.memory_space<vmem>>, %arg4: memref<32x32xf32, #tpu.memory_space<vmem>>, %arg5: memref<32x32xf32, #tpu.memory_space<vmem>>, %arg6: memref<32x32xf32, #tpu.memory_space<vmem>>, %arg7: memref<4x8x32xf32, #tpu.memory_space<vmem>>, %arg8: memref<1x1x16x32xf32, #tpu.memory_space<vmem>>, %arg9: memref<1x4x1x16x16xf32, #tpu.memory_space<vmem>>, %arg10: memref<4x16x16xf32, #tpu.memory_space<vmem>>) attributes {dimension_semantics = [#tpu.dimension_semantics<parallel>, #tpu.dimension_semantics<parallel>, #tpu.dimension_semantics<arbitrary>], iteration_bounds = array<i64: 2, 1, 4>, scalar_prefetch = 0 : i64, scratch_operands = 1 : i64, tpu.core_type = #tpu.core_type<tc>, window_params = [{transform_indices = @transform_0, window_bounds = array<i64: 1, 1, 16, 32>}, {pipeline_mode = #tpu.pipeline_mode<synchronous>, transform_indices = @transform_1, window_bounds = array<i64: 32, 32>}, {pipeline_mode = #tpu.pipeline_mode<synchronous>, transform_indices = @transform_2, window_bounds = array<i64: 32, 32>}, {pipeline_mode = #tpu.pipeline_mode<synchronous>, transform_indices = @transform_3, window_bounds = array<i64: 32, 32>}, {pipeline_mode = #tpu.pipeline_mode<synchronous>, transform_indices = @transform_4, window_bounds = array<i64: 4, 8, 32>}, {transform_indices = @transform_5, window_bounds = array<i64: 1, 1, 16, 32>}, {transform_indices = @transform_6, window_bounds = array<i64: 1, 4, 1, 16, 16>}]} {
    %c0 = arith.constant 0 : index
    %c0_0 = arith.constant 0 : index
    %c0_1 = arith.constant 0 : index
    %c0_2 = arith.constant 0 : index
    %0 = vector.load %arg3[%c0, %c0_0, %c0_1, %c0_2] : memref<1x1x16x32xf32, #tpu.memory_space<vmem>>, vector<1x1x16x32xf32>
    %1 = vector.shape_cast %0 : vector<1x1x16x32xf32> to vector<16x32xf32>
    %c0_3 = arith.constant 0 : index
    %c0_4 = arith.constant 0 : index
    %2 = vector.load %arg4[%c0_3, %c0_4] : memref<32x32xf32, #tpu.memory_space<vmem>>, vector<32x32xf32>
    %cst = arith.constant dense<0.000000e+00> : vector<16x32xf32>
    %3 = tpu.matmul %1, %2, %cst {dimension_numbers = #tpu.dot_dimension_numbers<[1], [0], [0], [1], [0, 0, 1, 1], [], []>} : vector<16x32xf32>, vector<32x32xf32>, vector<16x32xf32> -> vector<16x32xf32>
    %c0_5 = arith.constant 0 : index
    %c0_6 = arith.constant 0 : index
    %4 = vector.load %arg5[%c0_5, %c0_6] : memref<32x32xf32, #tpu.memory_space<vmem>>, vector<32x32xf32>
    %cst_7 = arith.constant dense<0.000000e+00> : vector<16x32xf32>
    %5 = tpu.matmul %1, %4, %cst_7 {dimension_numbers = #tpu.dot_dimension_numbers<[1], [0], [0], [1], [0, 0, 1, 1], [], []>} : vector<16x32xf32>, vector<32x32xf32>, vector<16x32xf32> -> vector<16x32xf32>
    %c0_8 = arith.constant 0 : index
    %c0_9 = arith.constant 0 : index
    %6 = vector.load %arg6[%c0_8, %c0_9] : memref<32x32xf32, #tpu.memory_space<vmem>>, vector<32x32xf32>
    %cst_10 = arith.constant dense<0.000000e+00> : vector<16x32xf32>
    %7 = tpu.matmul %1, %6, %cst_10 {dimension_numbers = #tpu.dot_dimension_numbers<[1], [0], [0], [1], [0, 0, 1, 1], [], []>} : vector<16x32xf32>, vector<32x32xf32>, vector<16x32xf32> -> vector<16x32xf32>
    %8 = vector.shape_cast %3 : vector<16x32xf32> to vector<16x4x8xf32>
    %9 = tpu.transpose %8, [1, 0, 2] : vector<16x4x8xf32> -> vector<4x16x8xf32>
    %10 = vector.shape_cast %5 : vector<16x32xf32> to vector<16x4x8xf32>
    %11 = tpu.transpose %10, [1, 0, 2] : vector<16x4x8xf32> -> vector<4x16x8xf32>
    %12 = vector.shape_cast %7 : vector<16x32xf32> to vector<16x4x8xf32>
    %13 = tpu.transpose %12, [1, 0, 2] : vector<16x4x8xf32> -> vector<4x16x8xf32>
    "tpu.trace_start"() <{level = 10 : i32, message = "hqd,hkd->hqk"}> : () -> ()
    %cst_11 = arith.constant dense<0.000000e+00> : vector<4x16x16xf32>
    %14 = tpu.matmul %9, %11, %cst_11 {dimension_numbers = #tpu.dot_dimension_numbers<[2], [2], [1], [1], [0, 0, 0, 1, 1, 1], [0], [0]>} : vector<4x16x8xf32>, vector<4x16x8xf32>, vector<4x16x16xf32> -> vector<4x16x16xf32>
    %c0_i32 = arith.constant 0 : i32
    "tpu.trace_stop"() : () -> ()
    %15 = arith.cmpi eq, %arg2, %c0_i32 : i32
    %16 = arith.extui %15 : i1 to i32
    %c0_i32_12 = arith.constant 0 : i32
    %17 = arith.cmpi ne, %16, %c0_i32_12 : i32
    scf.if %17 {
      %cst_37 = arith.constant 0.000000e+00 : f32
      %45 = vector.broadcast %cst_37 : f32 to vector<4x16x16xf32>
      %c0_38 = arith.constant 0 : index
      %c0_39 = arith.constant 0 : index
      %c0_40 = arith.constant 0 : index
      %46 = vector.load %arg10[%c0_38, %c0_39, %c0_40] : memref<4x16x16xf32, #tpu.memory_space<vmem>>, vector<4x16x16xf32>
      tpu.vector_store %arg10[%c0_38, %c0_39, %c0_40], %45 {strides = array<i32>} : memref<4x16x16xf32, #tpu.memory_space<vmem>>, vector<4x16x16xf32>,
    } else {
    }
    %c0_13 = arith.constant 0 : index
    %c0_14 = arith.constant 0 : index
    %c0_15 = arith.constant 0 : index
    %18 = vector.load %arg10[%c0_13, %c0_14, %c0_15] : memref<4x16x16xf32, #tpu.memory_space<vmem>>, vector<4x16x16xf32>
    %19 = arith.addf %18, %14 : vector<4x16x16xf32>
    %c0_16 = arith.constant 0 : index
    %c0_17 = arith.constant 0 : index
    %c0_18 = arith.constant 0 : index
    %20 = vector.load %arg10[%c0_16, %c0_17, %c0_18] : memref<4x16x16xf32, #tpu.memory_space<vmem>>, vector<4x16x16xf32>
    tpu.vector_store %arg10[%c0_16, %c0_17, %c0_18], %19 {strides = array<i32>} : memref<4x16x16xf32, #tpu.memory_space<vmem>>, vector<4x16x16xf32>,
    %c1_i32 = arith.constant 1 : i32
    %21 = arith.addi %arg2, %c1_i32 : i32
    %22 = arith.sitofp %21 : i32 to f32
    %cst_19 = arith.constant 1.000000e+00 : f32
    %23 = arith.divf %cst_19, %22 : f32
    %24 = vector.broadcast %23 : f32 to vector<4x16x16xf32>
    %25 = arith.mulf %19, %24 : vector<4x16x16xf32>
    %cst_20 = arith.constant dense<0xFF800000> : vector<4x16xf32>
    %26 = vector.multi_reduction <maximumf>, %25, %cst_20 [2] : vector<4x16x16xf32> to vector<4x16xf32>
    %27 = vector.shape_cast %26 : vector<4x16xf32> to vector<4x16x1xf32>
    %28 = vector.broadcast %27 : vector<4x16x1xf32> to vector<4x16x16xf32>
    %29 = arith.subf %25, %28 : vector<4x16x16xf32>
    %30 = math.exp %29 : vector<4x16x16xf32>
    %cst_21 = arith.constant dense<0.000000e+00> : vector<4x16xf32>
    %31 = vector.multi_reduction <add>, %30, %cst_21 [2] : vector<4x16x16xf32> to vector<4x16xf32>
    %32 = vector.shape_cast %31 : vector<4x16xf32> to vector<4x16x1xf32>
    %33 = vector.broadcast %32 : vector<4x16x1xf32> to vector<4x16x16xf32>
    %34 = arith.divf %30, %33 : vector<4x16x16xf32>
    %c0_22 = arith.constant 0 : index
    %c0_23 = arith.constant 0 : index
    %c0_24 = arith.constant 0 : index
    %c0_25 = arith.constant 0 : index
    %c0_26 = arith.constant 0 : index
    %35 = vector.load %arg9[%c0_22, %c0_23, %c0_24, %c0_25, %c0_26] : memref<1x4x1x16x16xf32, #tpu.memory_space<vmem>>, vector<1x4x1x16x16xf32>
    %36 = vector.shape_cast %35 : vector<1x4x1x16x16xf32> to vector<4x16x16xf32>
    %37 = vector.shape_cast %34 : vector<4x16x16xf32> to vector<1x4x1x16x16xf32>
    tpu.vector_store %arg9[%c0_22, %c0_23, %c0_24, %c0_25, %c0_26], %37 {strides = array<i32>} : memref<1x4x1x16x16xf32, #tpu.memory_space<vmem>>, vector<1x4x1x16x16xf32>,
    "tpu.trace_start"() <{level = 10 : i32, message = "hqk,hkd->hqd"}> : () -> ()
    %cst_27 = arith.constant dense<0.000000e+00> : vector<4x16x8xf32>
    %38 = tpu.matmul %34, %13, %cst_27 {dimension_numbers = #tpu.dot_dimension_numbers<[2], [1], [1], [2], [0, 0, 0, 1, 1, 2], [0], [0]>} : vector<4x16x16xf32>, vector<4x16x8xf32>, vector<4x16x8xf32> -> vector<4x16x8xf32>
    "tpu.trace_stop"() : () -> ()
    %c0_28 = arith.constant 0 : index
    %c0_29 = arith.constant 0 : index
    %c0_30 = arith.constant 0 : index
    %39 = vector.load %arg7[%c0_28, %c0_29, %c0_30] : memref<4x8x32xf32, #tpu.memory_space<vmem>>, vector<4x8x32xf32>
    "tpu.trace_start"() <{level = 10 : i32, message = "hqd,hde->hqe"}> : () -> ()
    %cst_31 = arith.constant dense<0.000000e+00> : vector<4x16x32xf32>
    %40 = tpu.matmul %38, %39, %cst_31 {dimension_numbers = #tpu.dot_dimension_numbers<[2], [1], [1], [2], [0, 0, 0, 1, 1, 2], [0], [0]>} : vector<4x16x8xf32>, vector<4x8x32xf32>, vector<4x16x32xf32> -> vector<4x16x32xf32>
    "tpu.trace_stop"() : () -> ()
    %cst_32 = arith.constant dense<0.000000e+00> : vector<16x32xf32>
    %41 = vector.multi_reduction <add>, %40, %cst_32 [0] : vector<4x16x32xf32> to vector<16x32xf32>
    %c0_33 = arith.constant 0 : index
    %c0_34 = arith.constant 0 : index
    %c0_35 = arith.constant 0 : index
    %c0_36 = arith.constant 0 : index
    %42 = vector.load %arg8[%c0_33, %c0_34, %c0_35, %c0_36] : memref<1x1x16x32xf32, #tpu.memory_space<vmem>>, vector<1x1x16x32xf32>
    %43 = vector.shape_cast %42 : vector<1x1x16x32xf32> to vector<16x32xf32>
    %44 = vector.shape_cast %41 : vector<16x32xf32> to vector<1x1x16x32xf32>
    tpu.vector_store %arg8[%c0_33, %c0_34, %c0_35, %c0_36], %44 {strides = array<i32>} : memref<1x1x16x32xf32, #tpu.memory_space<vmem>>, vector<1x1x16x32xf32>,
    return
  }
  func.func @transform_0(%arg0: i32, %arg1: i32, %arg2: i32) -> (i32, i32, i32, i32) {
    %c0_i32 = arith.constant 0 : i32
    %c0_i32_0 = arith.constant 0 : i32
    %c0_i32_1 = arith.constant 0 : i32
    return %arg2, %arg0, %c0_i32, %c0_i32_0 : i32, i32, i32, i32
  }
  func.func @transform_1(%arg0: i32, %arg1: i32, %arg2: i32) -> (i32, i32) {
    %c0_i32 = arith.constant 0 : i32
    %c0_i32_0 = arith.constant 0 : i32
    %c0_i32_1 = arith.constant 0 : i32
    return %c0_i32, %c0_i32_0 : i32, i32
  }
  func.func @transform_2(%arg0: i32, %arg1: i32, %arg2: i32) -> (i32, i32) {
    %c0_i32 = arith.constant 0 : i32
    %c0_i32_0 = arith.constant 0 : i32
    %c0_i32_1 = arith.constant 0 : i32
    return %c0_i32, %c0_i32_0 : i32, i32
  }
  func.func @transform_3(%arg0: i32, %arg1: i32, %arg2: i32) -> (i32, i32) {
    %c0_i32 = arith.constant 0 : i32
    %c0_i32_0 = arith.constant 0 : i32
    %c0_i32_1 = arith.constant 0 : i32
    return %c0_i32, %c0_i32_0 : i32, i32
  }
  func.func @transform_4(%arg0: i32, %arg1: i32, %arg2: i32) -> (i32, i32, i32) {
    %c0_i32 = arith.constant 0 : i32
    %c0_i32_0 = arith.constant 0 : i32
    %c0_i32_1 = arith.constant 0 : i32
    %c0_i32_2 = arith.constant 0 : i32
    return %c0_i32, %c0_i32_0, %c0_i32_1 : i32, i32, i32
  }
  func.func @transform_5(%arg0: i32, %arg1: i32, %arg2: i32) -> (i32, i32, i32, i32) {
    %c0_i32 = arith.constant 0 : i32
    %c0_i32_0 = arith.constant 0 : i32
    return %arg2, %arg0, %arg1, %c0_i32 : i32, i32, i32, i32
  }
  func.func @transform_6(%arg0: i32, %arg1: i32, %arg2: i32) -> (i32, i32, i32, i32, i32) {
    %c0_i32 = arith.constant 0 : i32
    %c0_i32_0 = arith.constant 0 : i32
    %c0_i32_1 = arith.constant 0 : i32
    return %arg2, %c0_i32, %arg0, %arg1, %c0_i32_0 : i32, i32, i32, i32, i32
  }
}

</mosaic_0001>

<llo_original>
// kernel: tpu_custom_call.1
$region0: #{tpu_custom_call.1}
  #allocation0 [shape = 'u32[]', space=smem, size = 0x4, offset = 0x4, fixed_abs, tag = 'smem constant byte address 0x4 - core index']
  #allocation1 [shape = 'u32[144,128]{1,0:T(1,128)}', space=vmem, size = 0x12000, scoped, tag = 'internal scratch']
  #allocation2 [shape = 'f32[4,16,16]{2,1,0:T(8,128)}', space=vmem, size = 0x8000, scoped, tag = 'scratch operand']
  #allocation15 [shape = 's32[]', space=sflag, size = 0x4, offset = 0, fixed_abs, tag = 'sflag constant byte address 0x0 - dummy sync flag']
  %s0 = inlined_call_operand.hbm [shape: f32[4,2,16,32], index: 0, kind: input, shape index: {}]
  %s1 = inlined_call_operand.hbm [shape: f32[32,32], index: 1, kind: input, shape index: {}]
  %s2 = inlined_call_operand.hbm [shape: f32[32,32], index: 2, kind: input, shape index: {}]
  %s3 = inlined_call_operand.hbm [shape: f32[32,32], index: 3, kind: input, shape index: {}]
  %s4 = inlined_call_operand.hbm [shape: f32[4,8,32], index: 4, kind: input, shape index: {}]
  %s5 = inlined_call_operand.hbm [shape: f32[4,2,16,32], index: 5, kind: output, shape index: {0}]
  %s6 = inlined_call_operand.hbm [shape: f32[4,4,2,16,16], index: 6, kind: output, shape index: {1}]
  %7 = xla_tuple %s5, %s6
  %s8 = sld [smem:[#allocation0]]
  $region85: #{tpu_custom_call.1} parent=0
    _
  %s10 = ssub.s32 1, %s8
  %s11 = scalar_select 0, %s10, %s8
  $region1: #{tpu_custom_call.1} parent=0
    #allocation3 [shape = 'u8[16384]{0}', space=vmem, size = 0x4000, scoped, tag = 'input window, operand 0']
    #allocation4 [shape = 's32[2]{0}', space=sflag, size = 0x8, scoped, tag = 'scoped memory for tpu_custom_call.1']
    #allocation5 [shape = 's32[2]{0}', space=sflag, size = 0x8, scoped, tag = 'scoped memory for tpu_custom_call.1']
    #allocation6 [shape = 'u8[16384]{0}', space=vmem, size = 0x4000, scoped, tag = 'input window, operand 1, single buffered']
    #allocation7 [shape = 's32[1]{0}', space=sflag, size = 0x4, scoped, tag = 'scoped memory for tpu_custom_call.1']
    #allocation8 [shape = 'u8[16384]{0}', space=vmem, size = 0x4000, scoped, tag = 'input window, operand 2, single buffered']
    #allocation9 [shape = 'u8[16384]{0}', space=vmem, size = 0x4000, scoped, tag = 'input window, operand 3, single buffered']
    #allocation10 [shape = 's32[1]{0}', space=sflag, size = 0x4, scoped, tag = 'scoped memory for tpu_custom_call.1']
    #allocation11 [shape = 'u8[16384]{0}', space=vmem, size = 0x4000, scoped, tag = 'input window, operand 4, single buffered']
    #allocation12 [shape = 'u8[16384]{0}', space=vmem, size = 0x4000, scoped, tag = 'output window, operand 0']
    #allocation13 [shape = 'u8[65536]{0}', space=vmem, size = 0x10000, scoped, tag = 'output window, operand 1']
    #allocation14 [shape = 's32[2]{0}', space=sflag, size = 0x8, scoped, tag = 'scoped memory for tpu_custom_call.1']
    %12 = vsyncpa [#allocation4], 0
    %s13 = scalar_lea.sflag [#allocation4], 1
    %14 = vsyncpa %s13, 0
    %15 = vsyncpa [#allocation7], 0
    %16 = vsyncpa [#allocation10], 0
    %17 = vsyncpa [#allocation5], 0
    %s18 = scalar_lea.sflag [#allocation5], 1
    %19 = vsyncpa %s18, 0
    %20 = vsyncpa [#allocation14], 0
    %s21 = scalar_lea.sflag [#allocation14], 1
    %22 = vsyncpa %s21, 0
    loop: start=0, step=1, limit=10
    $region2: #{tpu_custom_call.1} parent=1 // loop_pre_header
      _
    $region3: #{tpu_custom_call.1} parent=1 // loop_header
      %s24 = sphi 0, %s28
      %p25 = scmp.ge.s32.totalorder %s24, 10
      %s31 = sphi 0, %s50
      %s32 = sphi 0, %s46
      %s33 = sphi 0, %s42
      %s34 = sphi 0, %s31
      %s35 = sphi 0, %s32
      %s36 = sphi 0, %s33
      %s37 = sphi 0, %s34
      %s38 = sphi 0, %s35
      %s39 = sphi 0, %s36
      %s55 = sphi 0, %s57
      %s58 = sphi 0, %s55
      %s59 = sphi 0, %s58
      %s75 = sphi 0, %s59
      %s79 = sphi 0, %s79
      %s81 = sphi 0, %s79
      %s82 = sphi 0, %s81
      %s96 = sphi 0, %s82
      %s100 = sphi 0, %s100
      %s102 = sphi 0, %s100
      %s103 = sphi 0, %s102
      %s117 = sphi 0, %s103
      %s121 = sphi 0, %s121
      %s123 = sphi 0, %s121
      %s124 = sphi 0, %s123
      %s138 = sphi 0, %s124
      %s142 = sphi 0, %s142
      %s144 = sphi 0, %s142
      %s145 = sphi 0, %s144
      %s159 = sphi 0, %s145
      %s169 = sphi 0, %s171
      %s172 = sphi 0, %s169
      %s173 = sphi 0, %s172
      %s189 = sphi 0, %s173
      %s199 = sphi 0, %s201
      %s202 = sphi 0, %s199
      %s203 = sphi 0, %s202
      %s219 = sphi 0, %s203
    $region4: #{tpu_custom_call.1} parent=1 // loop_header_branch
      %27 = sbr.rel (%p25) target = $region8
    $region5: #{tpu_custom_call.1} parent=1 // loop_body
      %s29 = ssub.s32 %s24, 1
      %s30 = ssub.s32 %s24, 2
      %s40 = sadd.s32 1, %s33
      %p41 = scmp.ge.s32.totalorder %s40, 4
      %s42 = scalar_select %p41, 0, %s40
      %s43 = sadd.s32 1, %s32
      %s44 = scalar_select %p41, %s43, %s32
      %p45 = scmp.ge.s32.totalorder %s44, 1
      %s46 = scalar_select %p45, 0, %s44
      %s47 = sadd.s32 1, %s31
      %s48 = scalar_select %p45, %s47, %s31
      %p49 = scmp.ge.s32.totalorder %s48, 2
      %s50 = scalar_select %p49, 0, %s48
      %s51 = ssub.s32 %s33, %s42
      %s52 = ssub.s32 %s31, %s50
      %s53 = sor.u32 %s51, %s52
      %p54 = scmp.eq.s32.totalorder %s53, 0
      %s56 = sadd.s32 %s55, 1
      %s57 = scalar_select %p54, %s55, %s56
      %p60 = pneg %p54
      %p61 = scmp.eq.s32.totalorder %s24, 7
      %p62 = por %p60, %p61
      %p63 = scmp.ne.s32.totalorder %s55, %s58
      %p64 = scmp.eq.s32.totalorder %s24, 0
      %p65 = por %p63, %p64
      %p66 = scmp.ne.s32.totalorder %s55, %s58
      %p67 = scmp.eq.s32.totalorder %s29, 7
      %p68 = por %p66, %p67
      %p69 = scmp.ne.s32.totalorder %s58, %s59
      %p70 = scmp.eq.s32.totalorder %s29, 0
      %p71 = por %p69, %p70
      %p72 = scmp.ne.s32.totalorder %s58, %s59
      %p73 = scmp.eq.s32.totalorder %s30, 7
      %p74 = por %p72, %p73
      %p76 = scmp.ne.s32.totalorder %s59, %s75
      %p77 = scmp.eq.s32.totalorder %s30, 0
      %p78 = por %p76, %p77
      %s80 = sadd.s32 %s79, 1
      %p83 = scmp.eq.s32.totalorder %s24, 7
      %p84 = scmp.ne.s32.totalorder %s79, %s81
      %p85 = scmp.eq.s32.totalorder %s24, 0
      %p86 = por %p84, %p85
      %p87 = scmp.ne.s32.totalorder %s79, %s81
      %p88 = scmp.eq.s32.totalorder %s29, 7
      %p89 = por %p87, %p88
      %p90 = scmp.ne.s32.totalorder %s81, %s82
      %p91 = scmp.eq.s32.totalorder %s29, 0
      %p92 = por %p90, %p91
      %p93 = scmp.ne.s32.totalorder %s81, %s82
      %p94 = scmp.eq.s32.totalorder %s30, 7
      %p95 = por %p93, %p94
      %p97 = scmp.ne.s32.totalorder %s82, %s96
      %p98 = scmp.eq.s32.totalorder %s30, 0
      %p99 = por %p97, %p98
      %s101 = sadd.s32 %s100, 1
      %p104 = scmp.eq.s32.totalorder %s24, 7
      %p105 = scmp.ne.s32.totalorder %s100, %s102
      %p106 = scmp.eq.s32.totalorder %s24, 0
      %p107 = por %p105, %p106
      %p108 = scmp.ne.s32.totalorder %s100, %s102
      %p109 = scmp.eq.s32.totalorder %s29, 7
      %p110 = por %p108, %p109
      %p111 = scmp.ne.s32.totalorder %s102, %s103
      %p112 = scmp.eq.s32.totalorder %s29, 0
      %p113 = por %p111, %p112
      %p114 = scmp.ne.s32.totalorder %s102, %s103
      %p115 = scmp.eq.s32.totalorder %s30, 7
      %p116 = por %p114, %p115
      %p118 = scmp.ne.s32.totalorder %s103, %s117
      %p119 = scmp.eq.s32.totalorder %s30, 0
      %p120 = por %p118, %p119
      %s122 = sadd.s32 %s121, 1
      %p125 = scmp.eq.s32.totalorder %s24, 7
      %p126 = scmp.ne.s32.totalorder %s121, %s123
      %p127 = scmp.eq.s32.totalorder %s24, 0
      %p128 = por %p126, %p127
      %p129 = scmp.ne.s32.totalorder %s121, %s123
      %p130 = scmp.eq.s32.totalorder %s29, 7
      %p131 = por %p129, %p130
      %p132 = scmp.ne.s32.totalorder %s123, %s124
      %p133 = scmp.eq.s32.totalorder %s29, 0
      %p134 = por %p132, %p133
      %p135 = scmp.ne.s32.totalorder %s123, %s124
      %p136 = scmp.eq.s32.totalorder %s30, 7
      %p137 = por %p135, %p136
      %p139 = scmp.ne.s32.totalorder %s124, %s138
      %p140 = scmp.eq.s32.totalorder %s30, 0
      %p141 = por %p139, %p140
      %s143 = sadd.s32 %s142, 1
      %p146 = scmp.eq.s32.totalorder %s24, 7
      %p147 = scmp.ne.s32.totalorder %s142, %s144
      %p148 = scmp.eq.s32.totalorder %s24, 0
      %p149 = por %p147, %p148
      %p150 = scmp.ne.s32.totalorder %s142, %s144
      %p151 = scmp.eq.s32.totalorder %s29, 7
      %p152 = por %p150, %p151
      %p153 = scmp.ne.s32.totalorder %s144, %s145
      %p154 = scmp.eq.s32.totalorder %s29, 0
      %p155 = por %p153, %p154
      %p156 = scmp.ne.s32.totalorder %s144, %s145
      %p157 = scmp.eq.s32.totalorder %s30, 7
      %p158 = por %p156, %p157
      %p160 = scmp.ne.s32.totalorder %s145, %s159
      %p161 = scmp.eq.s32.totalorder %s30, 0
      %p162 = por %p160, %p161
      %s163 = ssub.s32 %s33, %s42
      %s164 = ssub.s32 %s31, %s50
      %s165 = sor.u32 %s163, %s164
      %s166 = ssub.s32 %s32, %s46
      %s167 = sor.u32 %s165, %s166
      %p168 = scmp.eq.s32.totalorder %s167, 0
      %s170 = sadd.s32 %s169, 1
      %s171 = scalar_select %p168, %s169, %s170
      %p174 = pneg %p168
      %p175 = scmp.eq.s32.totalorder %s24, 7
      %p176 = por %p174, %p175
      %p177 = scmp.ne.s32.totalorder %s169, %s172
      %p178 = scmp.eq.s32.totalorder %s24, 0
      %p179 = por %p177, %p178
      %p180 = scmp.ne.s32.totalorder %s169, %s172
      %p181 = scmp.eq.s32.totalorder %s29, 7
      %p182 = por %p180, %p181
      %p183 = scmp.ne.s32.totalorder %s172, %s173
      %p184 = scmp.eq.s32.totalorder %s29, 0
      %p185 = por %p183, %p184
      %p186 = scmp.ne.s32.totalorder %s172, %s173
      %p187 = scmp.eq.s32.totalorder %s30, 7
      %p188 = por %p186, %p187
      %p190 = scmp.ne.s32.totalorder %s173, %s189
      %p191 = scmp.eq.s32.totalorder %s30, 0
      %p192 = por %p190, %p191
      %s193 = ssub.s32 %s33, %s42
      %s194 = ssub.s32 %s31, %s50
      %s195 = sor.u32 %s193, %s194
      %s196 = ssub.s32 %s32, %s46
      %s197 = sor.u32 %s195, %s196
      %p198 = scmp.eq.s32.totalorder %s197, 0
      %s200 = sadd.s32 %s199, 1
      %s201 = scalar_select %p198, %s199, %s200
      %p204 = pneg %p198
      %p205 = scmp.eq.s32.totalorder %s24, 7
      %p206 = por %p204, %p205
      %p207 = scmp.ne.s32.totalorder %s199, %s202
      %p208 = scmp.eq.s32.totalorder %s24, 0
      %p209 = por %p207, %p208
      %p210 = scmp.ne.s32.totalorder %s199, %s202
      %p211 = scmp.eq.s32.totalorder %s29, 7
      %p212 = por %p210, %p211
      %p213 = scmp.ne.s32.totalorder %s202, %s203
      %p214 = scmp.eq.s32.totalorder %s29, 0
      %p215 = por %p213, %p214
      %p216 = scmp.ne.s32.totalorder %s202, %s203
      %p217 = scmp.eq.s32.totalorder %s30, 7
      %p218 = por %p216, %p217
      %p220 = scmp.ne.s32.totalorder %s203, %s219
      %p221 = scmp.eq.s32.totalorder %s30, 0
      %p222 = por %p220, %p221
      %p223 = scmp.le.s32.totalorder 1, %s24
      %p224 = scmp.lt.s32.totalorder %s24, 9
      %p225 = pnand %p223, %p224
      %p226 = pneg %p225
      // Predicated region
      $region9: #{tpu_custom_call.1} parent=5 // pred_check
        _
      $region10: #{tpu_custom_call.1} parent=5 // pred_check_branch
        %228 = sbr.rel (%p225) target = $region12
      $region11: #{tpu_custom_call.1} parent=5 // pred_region
        %s229 = ssub.s32 %s24, 1
        // Predicated region
        $region13: #{tpu_custom_call.1} parent=11 // pred_check
          %p230 = pneg %p92
        $region14: #{tpu_custom_call.1} parent=11 // pred_check_branch
          %232 = sbr.rel (%p230) target = $region16
        $region15: #{tpu_custom_call.1} parent=11 // pred_region
          %s234 = ssub.s32 512, 512
          %235 = vsyncadd [#allocation7], %s234
          %s236 = sshll.u32 [#allocation6], 4
          %s237 = int_to_ptr.vmem [resolvable:$true] %s236
          %242 = dma.hbm_to_vmem [thread:$0]  %s1, 512, %s237, [#allocation7], 128, 128, 8
        $region16: #{tpu_custom_call.1} parent=11 // pred_fallthru
          _
        // Predicated region
        $region17: #{tpu_custom_call.1} parent=11 // pred_check
          %p243 = pneg %p113
        $region18: #{tpu_custom_call.1} parent=11 // pred_check_branch
          %245 = sbr.rel (%p243) target = $region20
        $region19: #{tpu_custom_call.1} parent=11 // pred_region
          %s247 = ssub.s32 512, 512
          %248 = vsyncadd [#allocation7], %s247
          %s249 = sshll.u32 [#allocation8], 4
          %s250 = int_to_ptr.vmem [resolvable:$true] %s249
          %255 = dma.hbm_to_vmem [thread:$0]  %s2, 512, %s250, [#allocation7], 128, 128, 8
        $region20: #{tpu_custom_call.1} parent=11 // pred_fallthru
          _
        // Predicated region
        $region21: #{tpu_custom_call.1} parent=11 // pred_check
          %p256 = pneg %p134
        $region22: #{tpu_custom_call.1} parent=11 // pred_check_branch
          %258 = sbr.rel (%p256) target = $region24
        $region23: #{tpu_custom_call.1} parent=11 // pred_region
          %s260 = ssub.s32 512, 512
          %261 = vsyncadd [#allocation10], %s260
          %s262 = sshll.u32 [#allocation9], 4
          %s263 = int_to_ptr.vmem [resolvable:$true] %s262
          %268 = dma.hbm_to_vmem [thread:$0]  %s3, 512, %s263, [#allocation10], 128, 128, 8
        $region24: #{tpu_custom_call.1} parent=11 // pred_fallthru
          _
        // Predicated region
        $region25: #{tpu_custom_call.1} parent=11 // pred_check
          %p269 = pneg %p155
        $region26: #{tpu_custom_call.1} parent=11 // pred_check_branch
          %271 = sbr.rel (%p269) target = $region28
        $region27: #{tpu_custom_call.1} parent=11 // pred_region
          %s273 = ssub.s32 512, 512
          %274 = vsyncadd [#allocation10], %s273
          %s275 = sshll.u32 [#allocation11], 4
          %s276 = int_to_ptr.vmem [resolvable:$true] %s275
          %281 = dma.hbm_to_vmem [thread:$0]  %s4, 512, %s276, [#allocation10], 128, 128, 8
        $region28: #{tpu_custom_call.1} parent=11 // pred_fallthru
          _
      $region12: #{tpu_custom_call.1} parent=5 // pred_fallthru
        _
      %p282 = scmp.lt.s32.totalorder %s24, 8
      // Predicated region
      $region29: #{tpu_custom_call.1} parent=5 // pred_check
        %p283 = pneg %p282
      $region30: #{tpu_custom_call.1} parent=5 // pred_check_branch
        %285 = sbr.rel (%p283) target = $region32
      $region31: #{tpu_custom_call.1} parent=5 // pred_region
        // Predicated region
        $region33: #{tpu_custom_call.1} parent=31 // pred_check
          %p286 = pneg %p65
        $region34: #{tpu_custom_call.1} parent=31 // pred_check_branch
          %288 = sbr.rel (%p286) target = $region36
        $region35: #{tpu_custom_call.1} parent=31 // pred_region
          %s289 = sand.u32 %s55, 1
          %s290 = scalar_lea.sflag [#allocation4], %s289
          %s291 = sand.u32 %s55, 1
          %s292 = smul.addr %s291, 16
          %s293 = scalar_lea.vmem [#allocation3], %s292
          %s295 = ssub.s32 256, 256
          %296 = vsyncadd %s290, %s295
          %s297 = smul.addr %s31, 2
          %s298 = smul.addr %s33, 4
          %s299 = sadd.s32 %s297, %s298
          %s300 = smul.addr %s299, 128
          %s301 = scalar_lea.hbm %s0, %s300
          %s302 = sshll.u32 %s293, 4
          %s303 = int_to_ptr.vmem [resolvable:$true] %s302
          %308 = dma.hbm_to_vmem [thread:$0]  %s301, 256, %s303, %s290, 128, 128, 8
        $region36: #{tpu_custom_call.1} parent=31 // pred_fallthru
          _
      $region32: #{tpu_custom_call.1} parent=5 // pred_fallthru
        _
      %p309 = scmp.le.s32.totalorder 1, %s24
      %p310 = scmp.lt.s32.totalorder %s24, 9
      %p311 = pnand %p309, %p310
      %p312 = pneg %p311
      // Predicated region
      $region37: #{tpu_custom_call.1} parent=5 // pred_check
        _
      $region38: #{tpu_custom_call.1} parent=5 // pred_check_branch
        %314 = sbr.rel (%p311) target = $region40
      $region39: #{tpu_custom_call.1} parent=5 // pred_region
        %s315 = ssub.s32 %s24, 1
        %s316 = sand.u32 %s58, 1
        %s317 = scalar_lea.sflag [#allocation4], %s316
        %s318 = sand.u32 %s58, 1
        %s319 = smul.addr %s318, 16
        %s320 = scalar_lea.vmem [#allocation3], %s319
        // Predicated region
        $region41: #{tpu_custom_call.1} parent=39 // pred_check
          %p321 = pneg %p71
        $region42: #{tpu_custom_call.1} parent=39 // pred_check_branch
          %323 = sbr.rel (%p321) target = $region44
        $region43: #{tpu_custom_call.1} parent=39 // pred_region
          %324 = dma.done %s317, 256
        $region44: #{tpu_custom_call.1} parent=39 // pred_fallthru
          _
        // Predicated region
        $region45: #{tpu_custom_call.1} parent=39 // pred_check
          %p325 = pneg %p92
        $region46: #{tpu_custom_call.1} parent=39 // pred_check_branch
          %327 = sbr.rel (%p325) target = $region48
        $region47: #{tpu_custom_call.1} parent=39 // pred_region
          %328 = dma.done [#allocation7], 512
        $region48: #{tpu_custom_call.1} parent=39 // pred_fallthru
          _
        // Predicated region
        $region49: #{tpu_custom_call.1} parent=39 // pred_check
          %p329 = pneg %p113
        $region50: #{tpu_custom_call.1} parent=39 // pred_check_branch
          %331 = sbr.rel (%p329) target = $region52
        $region51: #{tpu_custom_call.1} parent=39 // pred_region
          %332 = dma.done [#allocation7], 512
        $region52: #{tpu_custom_call.1} parent=39 // pred_fallthru
          _
        // Predicated region
        $region53: #{tpu_custom_call.1} parent=39 // pred_check
          %p333 = pneg %p134
        $region54: #{tpu_custom_call.1} parent=39 // pred_check_branch
          %335 = sbr.rel (%p333) target = $region56
        $region55: #{tpu_custom_call.1} parent=39 // pred_region
          %336 = dma.done [#allocation10], 512
        $region56: #{tpu_custom_call.1} parent=39 // pred_fallthru
          _
        // Predicated region
        $region57: #{tpu_custom_call.1} parent=39 // pred_check
          %p337 = pneg %p155
        $region58: #{tpu_custom_call.1} parent=39 // pred_check_branch
          %339 = sbr.rel (%p337) target = $region60
        $region59: #{tpu_custom_call.1} parent=39 // pred_region
          %340 = dma.done [#allocation10], 512
        $region60: #{tpu_custom_call.1} parent=39 // pred_fallthru
          _
        %s341 = sand.u32 %s58, 1
        %s342 = scalar_lea.sflag [#allocation4], %s341
        %s343 = sand.u32 %s58, 1
        %s344 = smul.addr %s343, 16
        %s345 = scalar_lea.vmem [#allocation3], %s344
        %p346 = pneg %p71
        %p347 = pneg %p68
        %p348 = pneg %p92
        %p349 = pneg %p89
        %p350 = pneg %p113
        %p351 = pneg %p110
        %p352 = pneg %p134
        %p353 = pneg %p131
        %p354 = pneg %p155
        %p355 = pneg %p152
        %p356 = pneg %p185
        %p357 = pneg %p182
        %s358 = sand.u32 %s172, 1
        %s359 = scalar_lea.sflag [#allocation5], %s358
        %s360 = sand.u32 %s172, 1
        %s361 = smul.addr %s360, 16
        %s362 = scalar_lea.vmem [#allocation12], %s361
        %p363 = pneg %p215
        %p364 = pneg %p212
        %s365 = sand.u32 %s202, 1
        %s366 = scalar_lea.sflag [#allocation14], %s365
        %s367 = sand.u32 %s202, 1
        %s368 = smul.addr %s367, 64
        %s369 = scalar_lea.vmem [#allocation13], %s368
        %s370 = smul.u32 2, %s35
        %s371 = smul.u32 2, %s35
        %v372 = vld [vmem:[%s320] sm:$0xff]
        %v373 = vld [vmem:[%s320 + $0x8] sm:$0xff]
        %v374 = vld [vmem:[#allocation6] sm:$0xff]
        %v375 = vld [vmem:[#allocation6 + $0x8] sm:$0xff]
        %v376 = vld [vmem:[#allocation6 + $0x10] sm:$0xff]
        %v377 = vld [vmem:[#allocation6 + $0x18] sm:$0xff]
        %vm378 = vcmask 261120
        %v380 = vsel %vm378, %v372, 0
        %v383 = vsel %vm378, %v373, 0
        %385 = vmatprep.subr.mxu0 0.0
        %386 = vmatpush1.msra.mxu0 %v374
        %387 = vmatprep.subr.mxu0 0.0
        %388 = vmatpush1.msra.mxu0 %v375
        %389 = vmatprep.subr.mxu0 0.0
        %390 = vmatpush1.msra.mxu0 %v376
        %391 = vmatprep.subr.mxu0 0.0
        %392 = vmatpush1.msra.mxu0 %v377
        %393 = vmatprep.subr.mxu0 0.0
        %394 = vmatpush1.msra.mxu0 0.0
        %395 = vmatprep.subr.mxu0 0.0
        %396 = vmatpush1.msra.mxu0 0.0
        %397 = vmatprep.subr.mxu0 0.0
        %398 = vmatpush1.msra.mxu0 0.0
        %399 = vmatprep.subr.mxu0 0.0
        %400 = vmatpush1.msra.mxu0 0.0
        %401 = vmatprep.subr.mxu0 0.0
        %402 = vmatpush1.msra.mxu0 0.0
        %403 = vmatprep.subr.mxu0 0.0
        %404 = vmatpush1.msra.mxu0 0.0
        %405 = vmatprep.subr.mxu0 0.0
        %406 = vmatpush1.msra.mxu0 0.0
        %407 = vmatprep.subr.mxu0 0.0
        %408 = vmatpush1.msra.mxu0 0.0
        %409 = vmatprep.subr.mxu0 0.0
        %410 = vmatpush1.msra.mxu0 0.0
        %411 = vmatprep.subr.mxu0 0.0
        %412 = vmatpush1.msra.mxu0 0.0
        %413 = vmatprep.subr.mxu0 0.0
        %414 = vmatpush1.msra.mxu0 0.0
        %415 = vmatprep.subr.mxu0 0.0
        %416 = vmatpush1.msra.mxu0 0.0
        %417 = vmatprep.subr.mxu0 0.0
        %418 = vmatpush1.msra.mxu0 0.0
        %419 = vmatprep.subr.mxu0 0.0
        %420 = vmatpush1.msra.mxu0 0.0
        %421 = vmatprep.subr.mxu0 0.0
        %422 = vmatpush1.msra.mxu0 0.0
        %423 = vmatprep.subr.mxu0 0.0
        %424 = vmatpush1.msra.mxu0 0.0
        %425 = vmatprep.subr.mxu0 0.0
        %426 = vmatpush1.msra.mxu0 0.0
        %427 = vmatprep.subr.mxu0 0.0
        %428 = vmatpush1.msra.mxu0 0.0
        %429 = vmatprep.subr.mxu0 0.0
        %430 = vmatpush1.msra.mxu0 0.0
        %431 = vmatprep.subr.mxu0 0.0
        %432 = vmatpush1.msra.mxu0 0.0
        %433 = vmatprep.subr.mxu0 0.0
        %434 = vmatpush1.msra.mxu0 0.0
        %435 = vmatprep.subr.mxu0 0.0
        %436 = vmatpush1.msra.mxu0 0.0
        %437 = vmatprep.subr.mxu0 0.0
        %438 = vmatpush1.msra.mxu0 0.0
        %439 = vmatprep.subr.mxu0 0.0
        %440 = vmatpush1.msra.mxu0 0.0
        %441 = vmatprep.subr.mxu0 0.0
        %442 = vmatpush1.msra.mxu0 0.0
        %443 = vmatprep.subr.mxu0 0.0
        %444 = vmatpush1.msra.mxu0 0.0
        %445 = vmatprep.subr.mxu0 0.0
        %446 = vmatpush1.msra.mxu0 0.0
        %447 = vmatprep.subr.mxu0 0.0
        %448 = vmatpush1.msra.mxu0 0.0
        %449 = vmatprep.mubr.f32.mxu0 0.0
        %450 = vmatmul.mubr.f32.gmra.mrb[0].mxu0 %v380
        %v451 = vpop.f32.mrb[0].mxu0
        %v452 = vadd.f32 0.0, %v451
        %v453 = vpop.f32.mrb[0].mxu0
        %454 = vmatprep.mubr.f32.mxu0 0.0
        %455 = vmatmul.mubr.f32.gmra.mrb[0].mxu0 %v383
        %v456 = vpop.f32.mrb[0].mxu0
        %v457 = vadd.f32 0.0, %v456
        %v458 = vpop.f32.mrb[0].mxu0
        %459 = vdwg.mxu0
        %v460 = vld [vmem:[#allocation8] sm:$0xff]
        %v461 = vld [vmem:[#allocation8 + $0x8] sm:$0xff]
        %v462 = vld [vmem:[#allocation8 + $0x10] sm:$0xff]
        %v463 = vld [vmem:[#allocation8 + $0x18] sm:$0xff]
        %464 = vmatprep.subr.mxu0 0.0
        %465 = vmatpush1.msra.mxu0 %v460
        %466 = vmatprep.subr.mxu0 0.0
        %467 = vmatpush1.msra.mxu0 %v461
        %468 = vmatprep.subr.mxu0 0.0
        %469 = vmatpush1.msra.mxu0 %v462
        %470 = vmatprep.subr.mxu0 0.0
        %471 = vmatpush1.msra.mxu0 %v463
        %472 = vmatprep.subr.mxu0 0.0
        %473 = vmatpush1.msra.mxu0 0.0
        %474 = vmatprep.subr.mxu0 0.0
        %475 = vmatpush1.msra.mxu0 0.0
        %476 = vmatprep.subr.mxu0 0.0
        %477 = vmatpush1.msra.mxu0 0.0
        %478 = vmatprep.subr.mxu0 0.0
        %479 = vmatpush1.msra.mxu0 0.0
        %480 = vmatprep.subr.mxu0 0.0
        %481 = vmatpush1.msra.mxu0 0.0
        %482 = vmatprep.subr.mxu0 0.0
        %483 = vmatpush1.msra.mxu0 0.0
        %484 = vmatprep.subr.mxu0 0.0
        %485 = vmatpush1.msra.mxu0 0.0
        %486 = vmatprep.subr.mxu0 0.0
        %487 = vmatpush1.msra.mxu0 0.0
        %488 = vmatprep.subr.mxu0 0.0
        %489 = vmatpush1.msra.mxu0 0.0
        %490 = vmatprep.subr.mxu0 0.0
        %491 = vmatpush1.msra.mxu0 0.0
        %492 = vmatprep.subr.mxu0 0.0
        %493 = vmatpush1.msra.mxu0 0.0
        %494 = vmatprep.subr.mxu0 0.0
        %495 = vmatpush1.msra.mxu0 0.0
        %496 = vmatprep.subr.mxu0 0.0
        %497 = vmatpush1.msra.mxu0 0.0
        %498 = vmatprep.subr.mxu0 0.0
        %499 = vmatpush1.msra.mxu0 0.0
        %500 = vmatprep.subr.mxu0 0.0
        %501 = vmatpush1.msra.mxu0 0.0
        %502 = vmatprep.subr.mxu0 0.0
        %503 = vmatpush1.msra.mxu0 0.0
        %504 = vmatprep.subr.mxu0 0.0
        %505 = vmatpush1.msra.mxu0 0.0
        %506 = vmatprep.subr.mxu0 0.0
        %507 = vmatpush1.msra.mxu0 0.0
        %508 = vmatprep.subr.mxu0 0.0
        %509 = vmatpush1.msra.mxu0 0.0
        %510 = vmatprep.subr.mxu0 0.0
        %511 = vmatpush1.msra.mxu0 0.0
        %512 = vmatprep.subr.mxu0 0.0
        %513 = vmatpush1.msra.mxu0 0.0
        %514 = vmatprep.subr.mxu0 0.0
        %515 = vmatpush1.msra.mxu0 0.0
        %516 = vmatprep.subr.mxu0 0.0
        %517 = vmatpush1.msra.mxu0 0.0
        %518 = vmatprep.subr.mxu0 0.0
        %519 = vmatpush1.msra.mxu0 0.0
        %520 = vmatprep.subr.mxu0 0.0
        %521 = vmatpush1.msra.mxu0 0.0
        %522 = vmatprep.subr.mxu0 0.0
        %523 = vmatpush1.msra.mxu0 0.0
        %524 = vmatprep.subr.mxu0 0.0
        %525 = vmatpush1.msra.mxu0 0.0
        %526 = vmatprep.subr.mxu0 0.0
        %527 = vmatpush1.msra.mxu0 0.0
        %528 = vmatprep.mubr.f32.mxu0 0.0
        %529 = vmatmul.mubr.f32.gmra.mrb[0].mxu0 %v380
        %v530 = vpop.f32.mrb[0].mxu0
        %v531 = vadd.f32 0.0, %v530
        %v532 = vpop.f32.mrb[0].mxu0
        %533 = vmatprep.mubr.f32.mxu0 0.0
        %534 = vmatmul.mubr.f32.gmra.mrb[0].mxu0 %v383
        %v535 = vpop.f32.mrb[0].mxu0
        %v536 = vadd.f32 0.0, %v535
        %v537 = vpop.f32.mrb[0].mxu0
        %538 = vdwg.mxu0
        %v539 = vld [vmem:[#allocation9] sm:$0xff]
        %v540 = vld [vmem:[#allocation9 + $0x8] sm:$0xff]
        %v541 = vld [vmem:[#allocation9 + $0x10] sm:$0xff]
        %v542 = vld [vmem:[#allocation9 + $0x18] sm:$0xff]
        %543 = vmatprep.subr.mxu0 0.0
        %544 = vmatpush1.msra.mxu0 %v539
        %545 = vmatprep.subr.mxu0 0.0
        %546 = vmatpush1.msra.mxu0 %v540
        %547 = vmatprep.subr.mxu0 0.0
        %548 = vmatpush1.msra.mxu0 %v541
        %549 = vmatprep.subr.mxu0 0.0
        %550 = vmatpush1.msra.mxu0 %v542
        %551 = vmatprep.subr.mxu0 0.0
        %552 = vmatpush1.msra.mxu0 0.0
        %553 = vmatprep.subr.mxu0 0.0
        %554 = vmatpush1.msra.mxu0 0.0
        %555 = vmatprep.subr.mxu0 0.0
        %556 = vmatpush1.msra.mxu0 0.0
        %557 = vmatprep.subr.mxu0 0.0
        %558 = vmatpush1.msra.mxu0 0.0
        %559 = vmatprep.subr.mxu0 0.0
        %560 = vmatpush1.msra.mxu0 0.0
        %561 = vmatprep.subr.mxu0 0.0
        %562 = vmatpush1.msra.mxu0 0.0
        %563 = vmatprep.subr.mxu0 0.0
        %564 = vmatpush1.msra.mxu0 0.0
        %565 = vmatprep.subr.mxu0 0.0
        %566 = vmatpush1.msra.mxu0 0.0
        %567 = vmatprep.subr.mxu0 0.0
        %568 = vmatpush1.msra.mxu0 0.0
        %569 = vmatprep.subr.mxu0 0.0
        %570 = vmatpush1.msra.mxu0 0.0
        %571 = vmatprep.subr.mxu0 0.0
        %572 = vmatpush1.msra.mxu0 0.0
        %573 = vmatprep.subr.mxu0 0.0
        %574 = vmatpush1.msra.mxu0 0.0
        %575 = vmatprep.subr.mxu0 0.0
        %576 = vmatpush1.msra.mxu0 0.0
        %577 = vmatprep.subr.mxu0 0.0
        %578 = vmatpush1.msra.mxu0 0.0
        %579 = vmatprep.subr.mxu0 0.0
        %580 = vmatpush1.msra.mxu0 0.0
        %581 = vmatprep.subr.mxu0 0.0
        %582 = vmatpush1.msra.mxu0 0.0
        %583 = vmatprep.subr.mxu0 0.0
        %584 = vmatpush1.msra.mxu0 0.0
        %585 = vmatprep.subr.mxu0 0.0
        %586 = vmatpush1.msra.mxu0 0.0
        %587 = vmatprep.subr.mxu0 0.0
        %588 = vmatpush1.msra.mxu0 0.0
        %589 = vmatprep.subr.mxu0 0.0
        %590 = vmatpush1.msra.mxu0 0.0
        %591 = vmatprep.subr.mxu0 0.0
        %592 = vmatpush1.msra.mxu0 0.0
        %593 = vmatprep.subr.mxu0 0.0
        %594 = vmatpush1.msra.mxu0 0.0
        %595 = vmatprep.subr.mxu0 0.0
        %596 = vmatpush1.msra.mxu0 0.0
        %597 = vmatprep.subr.mxu0 0.0
        %598 = vmatpush1.msra.mxu0 0.0
        %599 = vmatprep.subr.mxu0 0.0
        %600 = vmatpush1.msra.mxu0 0.0
        %601 = vmatprep.subr.mxu0 0.0
        %602 = vmatpush1.msra.mxu0 0.0
        %603 = vmatprep.subr.mxu0 0.0
        %604 = vmatpush1.msra.mxu0 0.0
        %605 = vmatprep.subr.mxu0 0.0
        %606 = vmatpush1.msra.mxu0 0.0
        %607 = vmatprep.mubr.f32.mxu0 0.0
        %608 = vmatmul.mubr.f32.gmra.mrb[0].mxu0 %v380
        %v609 = vpop.f32.mrb[0].mxu0
        %v610 = vadd.f32 0.0, %v609
        %v611 = vpop.f32.mrb[0].mxu0
        %612 = vmatprep.mubr.f32.mxu0 0.0
        %613 = vmatmul.mubr.f32.gmra.mrb[0].mxu0 %v383
        %v614 = vpop.f32.mrb[0].mxu0
        %v615 = vadd.f32 0.0, %v614
        %v616 = vpop.f32.mrb[0].mxu0
        %617 = vdwg.mxu0
        %620 = vrot.lane.b32.xlu0 %v452, 120
        %v621 = vpop.permute.xlu0 %620
        %622 = vrot.lane.b32.xlu0 %v457, 120
        %v623 = vpop.permute.xlu0 %622
        %626 = vrot.lane.b32.xlu0 %v452, 112
        %v627 = vpop.permute.xlu0 %626
        %628 = vrot.lane.b32.xlu0 %v457, 112
        %v629 = vpop.permute.xlu0 %628
        %632 = vrot.lane.b32.xlu0 %v452, 104
        %v633 = vpop.permute.xlu0 %632
        %634 = vrot.lane.b32.xlu0 %v457, 104
        %v635 = vpop.permute.xlu0 %634
        %v638 = vcombine.low %v452, %v627
        %v639 = vcombine.high %v452, %v627
        %v641 = vunpack.c.l.s4 1983009808
        %v642 = vunpack.c.0.s8 %v641
        %v643 = vlaneseq
        %v644 = vshrl.u32 %v643, 7
        %v645 = vsub.s32 %v642, %v644
        %v646 = vrot.slane %v638, %v645
        %v648 = vunpack.c.l.s4 1983009808
        %v649 = vunpack.c.0.s8 %v648
        %v650 = vlaneseq
        %v651 = vshrl.u32 %v650, 7
        %v652 = vsub.s32 %v649, %v651
        %v653 = vrot.slane %v639, %v652
        %v654 = vcombine.low %v621, %v633
        %v655 = vcombine.high %v621, %v633
        %v657 = vunpack.c.l.s4 1983009808
        %v658 = vunpack.c.0.s8 %v657
        %v659 = vlaneseq
        %v660 = vshrl.u32 %v659, 7
        %v661 = vsub.s32 %v658, %v660
        %v662 = vrot.slane %v654, %v661
        %v664 = vunpack.c.l.s4 1983009808
        %v665 = vunpack.c.0.s8 %v664
        %v666 = vlaneseq
        %v667 = vshrl.u32 %v666, 7
        %v668 = vsub.s32 %v665, %v667
        %v669 = vrot.slane %v655, %v668
        %v670 = vcombine.low %v646, %v662
        %v671 = vcombine.high %v646, %v662
        %v673 = vunpack.c.l.s4 1934713408
        %v674 = vunpack.c.0.s8 %v673
        %v675 = vlaneseq
        %v676 = vshrl.u32 %v675, 7
        %v677 = vsub.s32 %v674, %v676
        %v678 = vrot.slane %v670, %v677
        %v680 = vunpack.c.l.s4 1934713408
        %v681 = vunpack.c.0.s8 %v680
        %v682 = vlaneseq
        %v683 = vshrl.u32 %v682, 7
        %v684 = vsub.s32 %v681, %v683
        %v685 = vrot.slane %v671, %v684
        %v686 = vcombine.low %v653, %v669
        %v687 = vcombine.high %v653, %v669
        %v689 = vunpack.c.l.s4 1934713408
        %v690 = vunpack.c.0.s8 %v689
        %v691 = vlaneseq
        %v692 = vshrl.u32 %v691, 7
        %v693 = vsub.s32 %v690, %v692
        %v694 = vrot.slane %v686, %v693
        %v696 = vunpack.c.l.s4 1934713408
        %v697 = vunpack.c.0.s8 %v696
        %v698 = vlaneseq
        %v699 = vshrl.u32 %v698, 7
        %v700 = vsub.s32 %v697, %v699
        %v701 = vrot.slane %v687, %v700
        %v702 = vcombine.high %v678, 0.0
        %v703 = vcombine.high %v685, 0.0
        %v704 = vcombine.high %v694, 0.0
        %v705 = vcombine.high %v701, 0.0
        %v706 = vcombine.low %v457, %v629
        %v707 = vcombine.high %v457, %v629
        %v709 = vunpack.c.l.s4 1983009808
        %v710 = vunpack.c.0.s8 %v709
        %v711 = vlaneseq
        %v712 = vshrl.u32 %v711, 7
        %v713 = vsub.s32 %v710, %v712
        %v714 = vrot.slane %v706, %v713
        %v716 = vunpack.c.l.s4 1983009808
        %v717 = vunpack.c.0.s8 %v716
        %v718 = vlaneseq
        %v719 = vshrl.u32 %v718, 7
        %v720 = vsub.s32 %v717, %v719
        %v721 = vrot.slane %v707, %v720
        %v722 = vcombine.low %v623, %v635
        %v723 = vcombine.high %v623, %v635
        %v725 = vunpack.c.l.s4 1983009808
        %v726 = vunpack.c.0.s8 %v725
        %v727 = vlaneseq
        %v728 = vshrl.u32 %v727, 7
        %v729 = vsub.s32 %v726, %v728
        %v730 = vrot.slane %v722, %v729
        %v732 = vunpack.c.l.s4 1983009808
        %v733 = vunpack.c.0.s8 %v732
        %v734 = vlaneseq
        %v735 = vshrl.u32 %v734, 7
        %v736 = vsub.s32 %v733, %v735
        %v737 = vrot.slane %v723, %v736
        %v738 = vcombine.low %v714, %v730
        %v739 = vcombine.high %v714, %v730
        %v741 = vunpack.c.l.s4 1934713408
        %v742 = vunpack.c.0.s8 %v741
        %v743 = vlaneseq
        %v744 = vshrl.u32 %v743, 7
        %v745 = vsub.s32 %v742, %v744
        %v746 = vrot.slane %v738, %v745
        %v748 = vunpack.c.l.s4 1934713408
        %v749 = vunpack.c.0.s8 %v748
        %v750 = vlaneseq
        %v751 = vshrl.u32 %v750, 7
        %v752 = vsub.s32 %v749, %v751
        %v753 = vrot.slane %v739, %v752
        %v754 = vcombine.low %v721, %v737
        %v755 = vcombine.high %v721, %v737
        %v757 = vunpack.c.l.s4 1934713408
        %v758 = vunpack.c.0.s8 %v757
        %v759 = vlaneseq
        %v760 = vshrl.u32 %v759, 7
        %v761 = vsub.s32 %v758, %v760
        %v762 = vrot.slane %v754, %v761
        %v764 = vunpack.c.l.s4 1934713408
        %v765 = vunpack.c.0.s8 %v764
        %v766 = vlaneseq
        %v767 = vshrl.u32 %v766, 7
        %v768 = vsub.s32 %v765, %v767
        %v769 = vrot.slane %v755, %v768
        %v770 = vcombine.high %v746, 0.0
        %v771 = vcombine.high %v753, 0.0
        %v772 = vcombine.high %v762, 0.0
        %v773 = vcombine.high %v769, 0.0
        %v774 = vcombine.low %v678, %v685
        %v776 = vunpack.c.l.s4 1983009808
        %v777 = vunpack.c.0.s8 %v776
        %v778 = vlaneseq
        %v779 = vshrl.u32 %v778, 7
        %v780 = vsub.s32 %v777, %v779
        %v781 = vrot.slane %v774, %v780
        %v782 = vcombine.low %v702, %v703
        %v784 = vunpack.c.l.s4 1983009808
        %v785 = vunpack.c.0.s8 %v784
        %v786 = vlaneseq
        %v787 = vshrl.u32 %v786, 7
        %v788 = vsub.s32 %v785, %v787
        %v789 = vrot.slane %v782, %v788
        %v790 = vcombine.low %v694, %v701
        %v792 = vunpack.c.l.s4 1983009808
        %v793 = vunpack.c.0.s8 %v792
        %v794 = vlaneseq
        %v795 = vshrl.u32 %v794, 7
        %v796 = vsub.s32 %v793, %v795
        %v797 = vrot.slane %v790, %v796
        %v798 = vcombine.low %v704, %v705
        %v800 = vunpack.c.l.s4 1983009808
        %v801 = vunpack.c.0.s8 %v800
        %v802 = vlaneseq
        %v803 = vshrl.u32 %v802, 7
        %v804 = vsub.s32 %v801, %v803
        %v805 = vrot.slane %v798, %v804
        %v806 = vcombine.low %v781, %v789
        %v807 = vcombine.high %v781, %v789
        %v809 = vunpack.c.l.s4 1934713408
        %v810 = vunpack.c.0.s8 %v809
        %v811 = vlaneseq
        %v812 = vshrl.u32 %v811, 7
        %v813 = vsub.s32 %v810, %v812
        %v814 = vrot.slane %v806, %v813
        %v816 = vunpack.c.l.s4 1934713408
        %v817 = vunpack.c.0.s8 %v816
        %v818 = vlaneseq
        %v819 = vshrl.u32 %v818, 7
        %v820 = vsub.s32 %v817, %v819
        %v821 = vrot.slane %v807, %v820
        %v822 = vcombine.low %v797, %v805
        %v823 = vcombine.high %v797, %v805
        %v825 = vunpack.c.l.s4 1934713408
        %v826 = vunpack.c.0.s8 %v825
        %v827 = vlaneseq
        %v828 = vshrl.u32 %v827, 7
        %v829 = vsub.s32 %v826, %v828
        %v830 = vrot.slane %v822, %v829
        %v832 = vunpack.c.l.s4 1934713408
        %v833 = vunpack.c.0.s8 %v832
        %v834 = vlaneseq
        %v835 = vshrl.u32 %v834, 7
        %v836 = vsub.s32 %v833, %v835
        %v837 = vrot.slane %v823, %v836
        %v838 = vcombine.low %v814, %v830
        %v839 = vcombine.high %v814, %v830
        %v840 = vcombine.low %v821, %v837
        %v841 = vcombine.high %v821, %v837
        %v842 = vcombine.low %v746, %v753
        %v844 = vunpack.c.l.s4 1983009808
        %v845 = vunpack.c.0.s8 %v844
        %v846 = vlaneseq
        %v847 = vshrl.u32 %v846, 7
        %v848 = vsub.s32 %v845, %v847
        %v849 = vrot.slane %v842, %v848
        %v850 = vcombine.low %v770, %v771
        %v852 = vunpack.c.l.s4 1983009808
        %v853 = vunpack.c.0.s8 %v852
        %v854 = vlaneseq
        %v855 = vshrl.u32 %v854, 7
        %v856 = vsub.s32 %v853, %v855
        %v857 = vrot.slane %v850, %v856
        %v858 = vcombine.low %v762, %v769
        %v860 = vunpack.c.l.s4 1983009808
        %v861 = vunpack.c.0.s8 %v860
        %v862 = vlaneseq
        %v863 = vshrl.u32 %v862, 7
        %v864 = vsub.s32 %v861, %v863
        %v865 = vrot.slane %v858, %v864
        %v866 = vcombine.low %v772, %v773
        %v868 = vunpack.c.l.s4 1983009808
        %v869 = vunpack.c.0.s8 %v868
        %v870 = vlaneseq
        %v871 = vshrl.u32 %v870, 7
        %v872 = vsub.s32 %v869, %v871
        %v873 = vrot.slane %v866, %v872
        %v874 = vcombine.low %v849, %v857
        %v875 = vcombine.high %v849, %v857
        %v877 = vunpack.c.l.s4 1934713408
        %v878 = vunpack.c.0.s8 %v877
        %v879 = vlaneseq
        %v880 = vshrl.u32 %v879, 7
        %v881 = vsub.s32 %v878, %v880
        %v882 = vrot.slane %v874, %v881
        %v884 = vunpack.c.l.s4 1934713408
        %v885 = vunpack.c.0.s8 %v884
        %v886 = vlaneseq
        %v887 = vshrl.u32 %v886, 7
        %v888 = vsub.s32 %v885, %v887
        %v889 = vrot.slane %v875, %v888
        %v890 = vcombine.low %v865, %v873
        %v891 = vcombine.high %v865, %v873
        %v893 = vunpack.c.l.s4 1934713408
        %v894 = vunpack.c.0.s8 %v893
        %v895 = vlaneseq
        %v896 = vshrl.u32 %v895, 7
        %v897 = vsub.s32 %v894, %v896
        %v898 = vrot.slane %v890, %v897
        %v900 = vunpack.c.l.s4 1934713408
        %v901 = vunpack.c.0.s8 %v900
        %v902 = vlaneseq
        %v903 = vshrl.u32 %v902, 7
        %v904 = vsub.s32 %v901, %v903
        %v905 = vrot.slane %v891, %v904
        %v906 = vcombine.low %v882, %v898
        %v907 = vcombine.high %v882, %v898
        %v908 = vcombine.low %v889, %v905
        %v909 = vcombine.high %v889, %v905
        %912 = vrot.lane.b32.xlu0 %v531, 120
        %v913 = vpop.permute.xlu0 %912
        %914 = vrot.lane.b32.xlu0 %v536, 120
        %v915 = vpop.permute.xlu0 %914
        %918 = vrot.lane.b32.xlu0 %v531, 112
        %v919 = vpop.permute.xlu0 %918
        %920 = vrot.lane.b32.xlu0 %v536, 112
        %v921 = vpop.permute.xlu0 %920
        %924 = vrot.lane.b32.xlu0 %v531, 104
        %v925 = vpop.permute.xlu0 %924
        %926 = vrot.lane.b32.xlu0 %v536, 104
        %v927 = vpop.permute.xlu0 %926
        %v930 = vcombine.low %v531, %v919
        %v931 = vcombine.high %v531, %v919
        %v933 = vunpack.c.l.s4 1983009808
        %v934 = vunpack.c.0.s8 %v933
        %v935 = vlaneseq
        %v936 = vshrl.u32 %v935, 7
        %v937 = vsub.s32 %v934, %v936
        %v938 = vrot.slane %v930, %v937
        %v940 = vunpack.c.l.s4 1983009808
        %v941 = vunpack.c.0.s8 %v940
        %v942 = vlaneseq
        %v943 = vshrl.u32 %v942, 7
        %v944 = vsub.s32 %v941, %v943
        %v945 = vrot.slane %v931, %v944
        %v946 = vcombine.low %v913, %v925
        %v947 = vcombine.high %v913, %v925
        %v949 = vunpack.c.l.s4 1983009808
        %v950 = vunpack.c.0.s8 %v949
        %v951 = vlaneseq
        %v952 = vshrl.u32 %v951, 7
        %v953 = vsub.s32 %v950, %v952
        %v954 = vrot.slane %v946, %v953
        %v956 = vunpack.c.l.s4 1983009808
        %v957 = vunpack.c.0.s8 %v956
        %v958 = vlaneseq
        %v959 = vshrl.u32 %v958, 7
        %v960 = vsub.s32 %v957, %v959
        %v961 = vrot.slane %v947, %v960
        %v962 = vcombine.low %v938, %v954
        %v963 = vcombine.high %v938, %v954
        %v965 = vunpack.c.l.s4 1934713408
        %v966 = vunpack.c.0.s8 %v965
        %v967 = vlaneseq
        %v968 = vshrl.u32 %v967, 7
        %v969 = vsub.s32 %v966, %v968
        %v970 = vrot.slane %v962, %v969
        %v972 = vunpack.c.l.s4 1934713408
        %v973 = vunpack.c.0.s8 %v972
        %v974 = vlaneseq
        %v975 = vshrl.u32 %v974, 7
        %v976 = vsub.s32 %v973, %v975
        %v977 = vrot.slane %v963, %v976
        %v978 = vcombine.low %v945, %v961
        %v979 = vcombine.high %v945, %v961
        %v981 = vunpack.c.l.s4 1934713408
        %v982 = vunpack.c.0.s8 %v981
        %v983 = vlaneseq
        %v984 = vshrl.u32 %v983, 7
        %v985 = vsub.s32 %v982, %v984
        %v986 = vrot.slane %v978, %v985
        %v988 = vunpack.c.l.s4 1934713408
        %v989 = vunpack.c.0.s8 %v988
        %v990 = vlaneseq
        %v991 = vshrl.u32 %v990, 7
        %v992 = vsub.s32 %v989, %v991
        %v993 = vrot.slane %v979, %v992
        %v994 = vcombine.high %v970, 0.0
        %v995 = vcombine.high %v977, 0.0
        %v996 = vcombine.high %v986, 0.0
        %v997 = vcombine.high %v993, 0.0
        %v998 = vcombine.low %v536, %v921
        %v999 = vcombine.high %v536, %v921
        %v1001 = vunpack.c.l.s4 1983009808
        %v1002 = vunpack.c.0.s8 %v1001
        %v1003 = vlaneseq
        %v1004 = vshrl.u32 %v1003, 7
        %v1005 = vsub.s32 %v1002, %v1004
        %v1006 = vrot.slane %v998, %v1005
        %v1008 = vunpack.c.l.s4 1983009808
        %v1009 = vunpack.c.0.s8 %v1008
        %v1010 = vlaneseq
        %v1011 = vshrl.u32 %v1010, 7
        %v1012 = vsub.s32 %v1009, %v1011
        %v1013 = vrot.slane %v999, %v1012
        %v1014 = vcombine.low %v915, %v927
        %v1015 = vcombine.high %v915, %v927
        %v1017 = vunpack.c.l.s4 1983009808
        %v1018 = vunpack.c.0.s8 %v1017
        %v1019 = vlaneseq
        %v1020 = vshrl.u32 %v1019, 7
        %v1021 = vsub.s32 %v1018, %v1020
        %v1022 = vrot.slane %v1014, %v1021
        %v1024 = vunpack.c.l.s4 1983009808
        %v1025 = vunpack.c.0.s8 %v1024
        %v1026 = vlaneseq
        %v1027 = vshrl.u32 %v1026, 7
        %v1028 = vsub.s32 %v1025, %v1027
        %v1029 = vrot.slane %v1015, %v1028
        %v1030 = vcombine.low %v1006, %v1022
        %v1031 = vcombine.high %v1006, %v1022
        %v1033 = vunpack.c.l.s4 1934713408
        %v1034 = vunpack.c.0.s8 %v1033
        %v1035 = vlaneseq
        %v1036 = vshrl.u32 %v1035, 7
        %v1037 = vsub.s32 %v1034, %v1036
        %v1038 = vrot.slane %v1030, %v1037
        %v1040 = vunpack.c.l.s4 1934713408
        %v1041 = vunpack.c.0.s8 %v1040
        %v1042 = vlaneseq
        %v1043 = vshrl.u32 %v1042, 7
        %v1044 = vsub.s32 %v1041, %v1043
        %v1045 = vrot.slane %v1031, %v1044
        %v1046 = vcombine.low %v1013, %v1029
        %v1047 = vcombine.high %v1013, %v1029
        %v1049 = vunpack.c.l.s4 1934713408
        %v1050 = vunpack.c.0.s8 %v1049
        %v1051 = vlaneseq
        %v1052 = vshrl.u32 %v1051, 7
        %v1053 = vsub.s32 %v1050, %v1052
        %v1054 = vrot.slane %v1046, %v1053
        %v1056 = vunpack.c.l.s4 1934713408
        %v1057 = vunpack.c.0.s8 %v1056
        %v1058 = vlaneseq
        %v1059 = vshrl.u32 %v1058, 7
        %v1060 = vsub.s32 %v1057, %v1059
        %v1061 = vrot.slane %v1047, %v1060
        %v1062 = vcombine.high %v1038, 0.0
        %v1063 = vcombine.high %v1045, 0.0
        %v1064 = vcombine.high %v1054, 0.0
        %v1065 = vcombine.high %v1061, 0.0
        %v1066 = vcombine.low %v970, %v977
        %v1068 = vunpack.c.l.s4 1983009808
        %v1069 = vunpack.c.0.s8 %v1068
        %v1070 = vlaneseq
        %v1071 = vshrl.u32 %v1070, 7
        %v1072 = vsub.s32 %v1069, %v1071
        %v1073 = vrot.slane %v1066, %v1072
        %v1074 = vcombine.low %v994, %v995
        %v1076 = vunpack.c.l.s4 1983009808
        %v1077 = vunpack.c.0.s8 %v1076
        %v1078 = vlaneseq
        %v1079 = vshrl.u32 %v1078, 7
        %v1080 = vsub.s32 %v1077, %v1079
        %v1081 = vrot.slane %v1074, %v1080
        %v1082 = vcombine.low %v986, %v993
        %v1084 = vunpack.c.l.s4 1983009808
        %v1085 = vunpack.c.0.s8 %v1084
        %v1086 = vlaneseq
        %v1087 = vshrl.u32 %v1086, 7
        %v1088 = vsub.s32 %v1085, %v1087
        %v1089 = vrot.slane %v1082, %v1088
        %v1090 = vcombine.low %v996, %v997
        %v1092 = vunpack.c.l.s4 1983009808
        %v1093 = vunpack.c.0.s8 %v1092
        %v1094 = vlaneseq
        %v1095 = vshrl.u32 %v1094, 7
        %v1096 = vsub.s32 %v1093, %v1095
        %v1097 = vrot.slane %v1090, %v1096
        %v1098 = vcombine.low %v1073, %v1081
        %v1099 = vcombine.high %v1073, %v1081
        %v1101 = vunpack.c.l.s4 1934713408
        %v1102 = vunpack.c.0.s8 %v1101
        %v1103 = vlaneseq
        %v1104 = vshrl.u32 %v1103, 7
        %v1105 = vsub.s32 %v1102, %v1104
        %v1106 = vrot.slane %v1098, %v1105
        %v1108 = vunpack.c.l.s4 1934713408
        %v1109 = vunpack.c.0.s8 %v1108
        %v1110 = vlaneseq
        %v1111 = vshrl.u32 %v1110, 7
        %v1112 = vsub.s32 %v1109, %v1111
        %v1113 = vrot.slane %v1099, %v1112
        %v1114 = vcombine.low %v1089, %v1097
        %v1115 = vcombine.high %v1089, %v1097
        %v1117 = vunpack.c.l.s4 1934713408
        %v1118 = vunpack.c.0.s8 %v1117
        %v1119 = vlaneseq
        %v1120 = vshrl.u32 %v1119, 7
        %v1121 = vsub.s32 %v1118, %v1120
        %v1122 = vrot.slane %v1114, %v1121
        %v1124 = vunpack.c.l.s4 1934713408
        %v1125 = vunpack.c.0.s8 %v1124
        %v1126 = vlaneseq
        %v1127 = vshrl.u32 %v1126, 7
        %v1128 = vsub.s32 %v1125, %v1127
        %v1129 = vrot.slane %v1115, %v1128
        %v1130 = vcombine.low %v1106, %v1122
        %v1131 = vcombine.high %v1106, %v1122
        %v1132 = vcombine.low %v1113, %v1129
        %v1133 = vcombine.high %v1113, %v1129
        %v1134 = vcombine.low %v1038, %v1045
        %v1136 = vunpack.c.l.s4 1983009808
        %v1137 = vunpack.c.0.s8 %v1136
        %v1138 = vlaneseq
        %v1139 = vshrl.u32 %v1138, 7
        %v1140 = vsub.s32 %v1137, %v1139
        %v1141 = vrot.slane %v1134, %v1140
        %v1142 = vcombine.low %v1062, %v1063
        %v1144 = vunpack.c.l.s4 1983009808
        %v1145 = vunpack.c.0.s8 %v1144
        %v1146 = vlaneseq
        %v1147 = vshrl.u32 %v1146, 7
        %v1148 = vsub.s32 %v1145, %v1147
        %v1149 = vrot.slane %v1142, %v1148
        %v1150 = vcombine.low %v1054, %v1061
        %v1152 = vunpack.c.l.s4 1983009808
        %v1153 = vunpack.c.0.s8 %v1152
        %v1154 = vlaneseq
        %v1155 = vshrl.u32 %v1154, 7
        %v1156 = vsub.s32 %v1153, %v1155
        %v1157 = vrot.slane %v1150, %v1156
        %v1158 = vcombine.low %v1064, %v1065
        %v1160 = vunpack.c.l.s4 1983009808
        %v1161 = vunpack.c.0.s8 %v1160
        %v1162 = vlaneseq
        %v1163 = vshrl.u32 %v1162, 7
        %v1164 = vsub.s32 %v1161, %v1163
        %v1165 = vrot.slane %v1158, %v1164
        %v1166 = vcombine.low %v1141, %v1149
        %v1167 = vcombine.high %v1141, %v1149
        %v1169 = vunpack.c.l.s4 1934713408
        %v1170 = vunpack.c.0.s8 %v1169
        %v1171 = vlaneseq
        %v1172 = vshrl.u32 %v1171, 7
        %v1173 = vsub.s32 %v1170, %v1172
        %v1174 = vrot.slane %v1166, %v1173
        %v1176 = vunpack.c.l.s4 1934713408
        %v1177 = vunpack.c.0.s8 %v1176
        %v1178 = vlaneseq
        %v1179 = vshrl.u32 %v1178, 7
        %v1180 = vsub.s32 %v1177, %v1179
        %v1181 = vrot.slane %v1167, %v1180
        %v1182 = vcombine.low %v1157, %v1165
        %v1183 = vcombine.high %v1157, %v1165
        %v1185 = vunpack.c.l.s4 1934713408
        %v1186 = vunpack.c.0.s8 %v1185
        %v1187 = vlaneseq
        %v1188 = vshrl.u32 %v1187, 7
        %v1189 = vsub.s32 %v1186, %v1188
        %v1190 = vrot.slane %v1182, %v1189
        %v1192 = vunpack.c.l.s4 1934713408
        %v1193 = vunpack.c.0.s8 %v1192
        %v1194 = vlaneseq
        %v1195 = vshrl.u32 %v1194, 7
        %v1196 = vsub.s32 %v1193, %v1195
        %v1197 = vrot.slane %v1183, %v1196
        %v1198 = vcombine.low %v1174, %v1190
        %v1199 = vcombine.high %v1174, %v1190
        %v1200 = vcombine.low %v1181, %v1197
        %v1201 = vcombine.high %v1181, %v1197
        %1204 = vrot.lane.b32.xlu0 %v610, 120
        %v1205 = vpop.permute.xlu0 %1204
        %1206 = vrot.lane.b32.xlu0 %v615, 120
        %v1207 = vpop.permute.xlu0 %1206
        %1210 = vrot.lane.b32.xlu0 %v610, 112
        %v1211 = vpop.permute.xlu0 %1210
        %1212 = vrot.lane.b32.xlu0 %v615, 112
        %v1213 = vpop.permute.xlu0 %1212
        %1216 = vrot.lane.b32.xlu0 %v610, 104
        %v1217 = vpop.permute.xlu0 %1216
        %1218 = vrot.lane.b32.xlu0 %v615, 104
        %v1219 = vpop.permute.xlu0 %1218
        %v1222 = vcombine.low %v610, %v1211
        %v1223 = vcombine.high %v610, %v1211
        %v1225 = vunpack.c.l.s4 1983009808
        %v1226 = vunpack.c.0.s8 %v1225
        %v1227 = vlaneseq
        %v1228 = vshrl.u32 %v1227, 7
        %v1229 = vsub.s32 %v1226, %v1228
        %v1230 = vrot.slane %v1222, %v1229
        %v1232 = vunpack.c.l.s4 1983009808
        %v1233 = vunpack.c.0.s8 %v1232
        %v1234 = vlaneseq
        %v1235 = vshrl.u32 %v1234, 7
        %v1236 = vsub.s32 %v1233, %v1235
        %v1237 = vrot.slane %v1223, %v1236
        %v1238 = vcombine.low %v1205, %v1217
        %v1239 = vcombine.high %v1205, %v1217
        %v1241 = vunpack.c.l.s4 1983009808
        %v1242 = vunpack.c.0.s8 %v1241
        %v1243 = vlaneseq
        %v1244 = vshrl.u32 %v1243, 7
        %v1245 = vsub.s32 %v1242, %v1244
        %v1246 = vrot.slane %v1238, %v1245
        %v1248 = vunpack.c.l.s4 1983009808
        %v1249 = vunpack.c.0.s8 %v1248
        %v1250 = vlaneseq
        %v1251 = vshrl.u32 %v1250, 7
        %v1252 = vsub.s32 %v1249, %v1251
        %v1253 = vrot.slane %v1239, %v1252
        %v1254 = vcombine.low %v1230, %v1246
        %v1255 = vcombine.high %v1230, %v1246
        %v1257 = vunpack.c.l.s4 1934713408
        %v1258 = vunpack.c.0.s8 %v1257
        %v1259 = vlaneseq
        %v1260 = vshrl.u32 %v1259, 7
        %v1261 = vsub.s32 %v1258, %v1260
        %v1262 = vrot.slane %v1254, %v1261
        %v1264 = vunpack.c.l.s4 1934713408
        %v1265 = vunpack.c.0.s8 %v1264
        %v1266 = vlaneseq
        %v1267 = vshrl.u32 %v1266, 7
        %v1268 = vsub.s32 %v1265, %v1267
        %v1269 = vrot.slane %v1255, %v1268
        %v1270 = vcombine.low %v1237, %v1253
        %v1271 = vcombine.high %v1237, %v1253
        %v1273 = vunpack.c.l.s4 1934713408
        %v1274 = vunpack.c.0.s8 %v1273
        %v1275 = vlaneseq
        %v1276 = vshrl.u32 %v1275, 7
        %v1277 = vsub.s32 %v1274, %v1276
        %v1278 = vrot.slane %v1270, %v1277
        %v1280 = vunpack.c.l.s4 1934713408
        %v1281 = vunpack.c.0.s8 %v1280
        %v1282 = vlaneseq
        %v1283 = vshrl.u32 %v1282, 7
        %v1284 = vsub.s32 %v1281, %v1283
        %v1285 = vrot.slane %v1271, %v1284
        %v1286 = vcombine.high %v1262, 0.0
        %v1287 = vcombine.high %v1269, 0.0
        %v1288 = vcombine.high %v1278, 0.0
        %v1289 = vcombine.high %v1285, 0.0
        %v1290 = vcombine.low %v615, %v1213
        %v1291 = vcombine.high %v615, %v1213
        %v1293 = vunpack.c.l.s4 1983009808
        %v1294 = vunpack.c.0.s8 %v1293
        %v1295 = vlaneseq
        %v1296 = vshrl.u32 %v1295, 7
        %v1297 = vsub.s32 %v1294, %v1296
        %v1298 = vrot.slane %v1290, %v1297
        %v1300 = vunpack.c.l.s4 1983009808
        %v1301 = vunpack.c.0.s8 %v1300
        %v1302 = vlaneseq
        %v1303 = vshrl.u32 %v1302, 7
        %v1304 = vsub.s32 %v1301, %v1303
        %v1305 = vrot.slane %v1291, %v1304
        %v1306 = vcombine.low %v1207, %v1219
        %v1307 = vcombine.high %v1207, %v1219
        %v1309 = vunpack.c.l.s4 1983009808
        %v1310 = vunpack.c.0.s8 %v1309
        %v1311 = vlaneseq
        %v1312 = vshrl.u32 %v1311, 7
        %v1313 = vsub.s32 %v1310, %v1312
        %v1314 = vrot.slane %v1306, %v1313
        %v1316 = vunpack.c.l.s4 1983009808
        %v1317 = vunpack.c.0.s8 %v1316
        %v1318 = vlaneseq
        %v1319 = vshrl.u32 %v1318, 7
        %v1320 = vsub.s32 %v1317, %v1319
        %v1321 = vrot.slane %v1307, %v1320
        %v1322 = vcombine.low %v1298, %v1314
        %v1323 = vcombine.high %v1298, %v1314
        %v1325 = vunpack.c.l.s4 1934713408
        %v1326 = vunpack.c.0.s8 %v1325
        %v1327 = vlaneseq
        %v1328 = vshrl.u32 %v1327, 7
        %v1329 = vsub.s32 %v1326, %v1328
        %v1330 = vrot.slane %v1322, %v1329
        %v1332 = vunpack.c.l.s4 1934713408
        %v1333 = vunpack.c.0.s8 %v1332
        %v1334 = vlaneseq
        %v1335 = vshrl.u32 %v1334, 7
        %v1336 = vsub.s32 %v1333, %v1335
        %v1337 = vrot.slane %v1323, %v1336
        %v1338 = vcombine.low %v1305, %v1321
        %v1339 = vcombine.high %v1305, %v1321
        %v1341 = vunpack.c.l.s4 1934713408
        %v1342 = vunpack.c.0.s8 %v1341
        %v1343 = vlaneseq
        %v1344 = vshrl.u32 %v1343, 7
        %v1345 = vsub.s32 %v1342, %v1344
        %v1346 = vrot.slane %v1338, %v1345
        %v1348 = vunpack.c.l.s4 1934713408
        %v1349 = vunpack.c.0.s8 %v1348
        %v1350 = vlaneseq
        %v1351 = vshrl.u32 %v1350, 7
        %v1352 = vsub.s32 %v1349, %v1351
        %v1353 = vrot.slane %v1339, %v1352
        %v1354 = vcombine.high %v1330, 0.0
        %v1355 = vcombine.high %v1337, 0.0
        %v1356 = vcombine.high %v1346, 0.0
        %v1357 = vcombine.high %v1353, 0.0
        %v1358 = vcombine.low %v1262, %v1269
        %v1360 = vunpack.c.l.s4 1983009808
        %v1361 = vunpack.c.0.s8 %v1360
        %v1362 = vlaneseq
        %v1363 = vshrl.u32 %v1362, 7
        %v1364 = vsub.s32 %v1361, %v1363
        %v1365 = vrot.slane %v1358, %v1364
        %v1366 = vcombine.low %v1286, %v1287
        %v1368 = vunpack.c.l.s4 1983009808
        %v1369 = vunpack.c.0.s8 %v1368
        %v1370 = vlaneseq
        %v1371 = vshrl.u32 %v1370, 7
        %v1372 = vsub.s32 %v1369, %v1371
        %v1373 = vrot.slane %v1366, %v1372
        %v1374 = vcombine.low %v1278, %v1285
        %v1376 = vunpack.c.l.s4 1983009808
        %v1377 = vunpack.c.0.s8 %v1376
        %v1378 = vlaneseq
        %v1379 = vshrl.u32 %v1378, 7
        %v1380 = vsub.s32 %v1377, %v1379
        %v1381 = vrot.slane %v1374, %v1380
        %v1382 = vcombine.low %v1288, %v1289
        %v1384 = vunpack.c.l.s4 1983009808
        %v1385 = vunpack.c.0.s8 %v1384
        %v1386 = vlaneseq
        %v1387 = vshrl.u32 %v1386, 7
        %v1388 = vsub.s32 %v1385, %v1387
        %v1389 = vrot.slane %v1382, %v1388
        %v1390 = vcombine.low %v1365, %v1373
        %v1391 = vcombine.high %v1365, %v1373
        %v1393 = vunpack.c.l.s4 1934713408
        %v1394 = vunpack.c.0.s8 %v1393
        %v1395 = vlaneseq
        %v1396 = vshrl.u32 %v1395, 7
        %v1397 = vsub.s32 %v1394, %v1396
        %v1398 = vrot.slane %v1390, %v1397
        %v1400 = vunpack.c.l.s4 1934713408
        %v1401 = vunpack.c.0.s8 %v1400
        %v1402 = vlaneseq
        %v1403 = vshrl.u32 %v1402, 7
        %v1404 = vsub.s32 %v1401, %v1403
        %v1405 = vrot.slane %v1391, %v1404
        %v1406 = vcombine.low %v1381, %v1389
        %v1407 = vcombine.high %v1381, %v1389
        %v1409 = vunpack.c.l.s4 1934713408
        %v1410 = vunpack.c.0.s8 %v1409
        %v1411 = vlaneseq
        %v1412 = vshrl.u32 %v1411, 7
        %v1413 = vsub.s32 %v1410, %v1412
        %v1414 = vrot.slane %v1406, %v1413
        %v1416 = vunpack.c.l.s4 1934713408
        %v1417 = vunpack.c.0.s8 %v1416
        %v1418 = vlaneseq
        %v1419 = vshrl.u32 %v1418, 7
        %v1420 = vsub.s32 %v1417, %v1419
        %v1421 = vrot.slane %v1407, %v1420
        %v1422 = vcombine.low %v1398, %v1414
        %v1423 = vcombine.high %v1398, %v1414
        %v1424 = vcombine.low %v1405, %v1421
        %v1425 = vcombine.high %v1405, %v1421
        %v1426 = vcombine.low %v1330, %v1337
        %v1428 = vunpack.c.l.s4 1983009808
        %v1429 = vunpack.c.0.s8 %v1428
        %v1430 = vlaneseq
        %v1431 = vshrl.u32 %v1430, 7
        %v1432 = vsub.s32 %v1429, %v1431
        %v1433 = vrot.slane %v1426, %v1432
        %v1434 = vcombine.low %v1354, %v1355
        %v1436 = vunpack.c.l.s4 1983009808
        %v1437 = vunpack.c.0.s8 %v1436
        %v1438 = vlaneseq
        %v1439 = vshrl.u32 %v1438, 7
        %v1440 = vsub.s32 %v1437, %v1439
        %v1441 = vrot.slane %v1434, %v1440
        %v1442 = vcombine.low %v1346, %v1353
        %v1444 = vunpack.c.l.s4 1983009808
        %v1445 = vunpack.c.0.s8 %v1444
        %v1446 = vlaneseq
        %v1447 = vshrl.u32 %v1446, 7
        %v1448 = vsub.s32 %v1445, %v1447
        %v1449 = vrot.slane %v1442, %v1448
        %v1450 = vcombine.low %v1356, %v1357
        %v1452 = vunpack.c.l.s4 1983009808
        %v1453 = vunpack.c.0.s8 %v1452
        %v1454 = vlaneseq
        %v1455 = vshrl.u32 %v1454, 7
        %v1456 = vsub.s32 %v1453, %v1455
        %v1457 = vrot.slane %v1450, %v1456
        %v1458 = vcombine.low %v1433, %v1441
        %v1459 = vcombine.high %v1433, %v1441
        %v1461 = vunpack.c.l.s4 1934713408
        %v1462 = vunpack.c.0.s8 %v1461
        %v1463 = vlaneseq
        %v1464 = vshrl.u32 %v1463, 7
        %v1465 = vsub.s32 %v1462, %v1464
        %v1466 = vrot.slane %v1458, %v1465
        %v1468 = vunpack.c.l.s4 1934713408
        %v1469 = vunpack.c.0.s8 %v1468
        %v1470 = vlaneseq
        %v1471 = vshrl.u32 %v1470, 7
        %v1472 = vsub.s32 %v1469, %v1471
        %v1473 = vrot.slane %v1459, %v1472
        %v1474 = vcombine.low %v1449, %v1457
        %v1475 = vcombine.high %v1449, %v1457
        %v1477 = vunpack.c.l.s4 1934713408
        %v1478 = vunpack.c.0.s8 %v1477
        %v1479 = vlaneseq
        %v1480 = vshrl.u32 %v1479, 7
        %v1481 = vsub.s32 %v1478, %v1480
        %v1482 = vrot.slane %v1474, %v1481
        %v1484 = vunpack.c.l.s4 1934713408
        %v1485 = vunpack.c.0.s8 %v1484
        %v1486 = vlaneseq
        %v1487 = vshrl.u32 %v1486, 7
        %v1488 = vsub.s32 %v1485, %v1487
        %v1489 = vrot.slane %v1475, %v1488
        %v1490 = vcombine.low %v1466, %v1482
        %v1491 = vcombine.high %v1466, %v1482
        %v1492 = vcombine.low %v1473, %v1489
        %v1493 = vcombine.high %v1473, %v1489
        %vm1494 = vcmask 64512
        %v1496 = vsel %vm1494, %v838, 0
        %v1499 = vsel %vm1494, %v906, 0
        %v1502 = vsel %vm1494, %v1130, 0
        %v1505 = vsel %vm1494, %v1198, 0
        %1507 = vmatprep.subr.mxu0 0.0
        %1508 = vmatpush1.xpose.msra.mxu0 %v1502
        %1509 = vmatprep.subr.mxu0 0.0
        %1510 = vmatpush1.xpose.msra.mxu0 %v1505
        %1511 = vmatprep.subr.mxu0 0.0
        %1512 = vmatpush1.xpose.msra.mxu0 0.0
        %1513 = vmatprep.subr.mxu0 0.0
        %1514 = vmatpush1.xpose.msra.mxu0 0.0
        %1515 = vmatprep.subr.mxu0 0.0
        %1516 = vmatpush1.xpose.msra.mxu0 0.0
        %1517 = vmatprep.subr.mxu0 0.0
        %1518 = vmatpush1.xpose.msra.mxu0 0.0
        %1519 = vmatprep.subr.mxu0 0.0
        %1520 = vmatpush1.xpose.msra.mxu0 0.0
        %1521 = vmatprep.subr.mxu0 0.0
        %1522 = vmatpush1.xpose.msra.mxu0 0.0
        %1523 = vmatprep.subr.mxu0 0.0
        %1524 = vmatpush1.xpose.msra.mxu0 0.0
        %1525 = vmatprep.subr.mxu0 0.0
        %1526 = vmatpush1.xpose.msra.mxu0 0.0
        %1527 = vmatprep.subr.mxu0 0.0
        %1528 = vmatpush1.xpose.msra.mxu0 0.0
        %1529 = vmatprep.subr.mxu0 0.0
        %1530 = vmatpush1.xpose.msra.mxu0 0.0
        %1531 = vmatprep.subr.mxu0 0.0
        %1532 = vmatpush1.xpose.msra.mxu0 0.0
        %1533 = vmatprep.subr.mxu0 0.0
        %1534 = vmatpush1.xpose.msra.mxu0 0.0
        %1535 = vmatprep.subr.mxu0 0.0
        %1536 = vmatpush1.xpose.msra.mxu0 0.0
        %1537 = vmatprep.subr.mxu0 0.0
        %1538 = vmatpush1.xpose.msra.mxu0 0.0
        %1539 = vmatprep.subr.mxu0 0.0
        %1540 = vmatpush1.xpose.msra.mxu0 0.0
        %1541 = vmatprep.subr.mxu0 0.0
        %1542 = vmatpush1.xpose.msra.mxu0 0.0
        %1543 = vmatprep.subr.mxu0 0.0
        %1544 = vmatpush1.xpose.msra.mxu0 0.0
        %1545 = vmatprep.subr.mxu0 0.0
        %1546 = vmatpush1.xpose.msra.mxu0 0.0
        %1547 = vmatprep.subr.mxu0 0.0
        %1548 = vmatpush1.xpose.msra.mxu0 0.0
        %1549 = vmatprep.subr.mxu0 0.0
        %1550 = vmatpush1.xpose.msra.mxu0 0.0
        %1551 = vmatprep.subr.mxu0 0.0
        %1552 = vmatpush1.xpose.msra.mxu0 0.0
        %1553 = vmatprep.subr.mxu0 0.0
        %1554 = vmatpush1.xpose.msra.mxu0 0.0
        %1555 = vmatprep.subr.mxu0 0.0
        %1556 = vmatpush1.xpose.msra.mxu0 0.0
        %1557 = vmatprep.subr.mxu0 0.0
        %1558 = vmatpush1.xpose.msra.mxu0 0.0
        %1559 = vmatprep.subr.mxu0 0.0
        %1560 = vmatpush1.xpose.msra.mxu0 0.0
        %1561 = vmatprep.subr.mxu0 0.0
        %1562 = vmatpush1.xpose.msra.mxu0 0.0
        %1563 = vmatprep.subr.mxu0 0.0
        %1564 = vmatpush1.xpose.msra.mxu0 0.0
        %1565 = vmatprep.subr.mxu0 0.0
        %1566 = vmatpush1.xpose.msra.mxu0 0.0
        %1567 = vmatprep.subr.mxu0 0.0
        %1568 = vmatpush1.xpose.msra.mxu0 0.0
        %1569 = vmatprep.subr.mxu0 0.0
        %1570 = vmatpush1.xpose.msra.mxu0 0.0
        %1571 = vmatprep.mubr.f32.mxu0 0.0
        %1572 = vmatmul.mubr.f32.gmra.mrb[0].mxu0 %v1496
        %v1573 = vpop.f32.mrb[0].mxu0
        %v1574 = vadd.f32 0.0, %v1573
        %v1575 = vpop.f32.mrb[0].mxu0
        %1576 = vmatprep.mubr.f32.mxu0 0.0
        %1577 = vmatmul.mubr.f32.gmra.mrb[0].mxu0 %v1499
        %v1578 = vpop.f32.mrb[0].mxu0
        %v1579 = vadd.f32 0.0, %v1578
        %v1580 = vpop.f32.mrb[0].mxu0
        %1581 = vdwg.mxu0
        %v1583 = vsel %vm1494, %v839, 0
        %v1586 = vsel %vm1494, %v907, 0
        %v1589 = vsel %vm1494, %v1131, 0
        %v1592 = vsel %vm1494, %v1199, 0
        %1594 = vmatprep.subr.mxu0 0.0
        %1595 = vmatpush1.xpose.msra.mxu0 %v1589
        %1596 = vmatprep.subr.mxu0 0.0
        %1597 = vmatpush1.xpose.msra.mxu0 %v1592
        %1598 = vmatprep.subr.mxu0 0.0
        %1599 = vmatpush1.xpose.msra.mxu0 0.0
        %1600 = vmatprep.subr.mxu0 0.0
        %1601 = vmatpush1.xpose.msra.mxu0 0.0
        %1602 = vmatprep.subr.mxu0 0.0
        %1603 = vmatpush1.xpose.msra.mxu0 0.0
        %1604 = vmatprep.subr.mxu0 0.0
        %1605 = vmatpush1.xpose.msra.mxu0 0.0
        %1606 = vmatprep.subr.mxu0 0.0
        %1607 = vmatpush1.xpose.msra.mxu0 0.0
        %1608 = vmatprep.subr.mxu0 0.0
        %1609 = vmatpush1.xpose.msra.mxu0 0.0
        %1610 = vmatprep.subr.mxu0 0.0
        %1611 = vmatpush1.xpose.msra.mxu0 0.0
        %1612 = vmatprep.subr.mxu0 0.0
        %1613 = vmatpush1.xpose.msra.mxu0 0.0
        %1614 = vmatprep.subr.mxu0 0.0
        %1615 = vmatpush1.xpose.msra.mxu0 0.0
        %1616 = vmatprep.subr.mxu0 0.0
        %1617 = vmatpush1.xpose.msra.mxu0 0.0
        %1618 = vmatprep.subr.mxu0 0.0
        %1619 = vmatpush1.xpose.msra.mxu0 0.0
        %1620 = vmatprep.subr.mxu0 0.0
        %1621 = vmatpush1.xpose.msra.mxu0 0.0
        %1622 = vmatprep.subr.mxu0 0.0
        %1623 = vmatpush1.xpose.msra.mxu0 0.0
        %1624 = vmatprep.subr.mxu0 0.0
        %1625 = vmatpush1.xpose.msra.mxu0 0.0
        %1626 = vmatprep.subr.mxu0 0.0
        %1627 = vmatpush1.xpose.msra.mxu0 0.0
        %1628 = vmatprep.subr.mxu0 0.0
        %1629 = vmatpush1.xpose.msra.mxu0 0.0
        %1630 = vmatprep.subr.mxu0 0.0
        %1631 = vmatpush1.xpose.msra.mxu0 0.0
        %1632 = vmatprep.subr.mxu0 0.0
        %1633 = vmatpush1.xpose.msra.mxu0 0.0
        %1634 = vmatprep.subr.mxu0 0.0
        %1635 = vmatpush1.xpose.msra.mxu0 0.0
        %1636 = vmatprep.subr.mxu0 0.0
        %1637 = vmatpush1.xpose.msra.mxu0 0.0
        %1638 = vmatprep.subr.mxu0 0.0
        %1639 = vmatpush1.xpose.msra.mxu0 0.0
        %1640 = vmatprep.subr.mxu0 0.0
        %1641 = vmatpush1.xpose.msra.mxu0 0.0
        %1642 = vmatprep.subr.mxu0 0.0
        %1643 = vmatpush1.xpose.msra.mxu0 0.0
        %1644 = vmatprep.subr.mxu0 0.0
        %1645 = vmatpush1.xpose.msra.mxu0 0.0
        %1646 = vmatprep.subr.mxu0 0.0
        %1647 = vmatpush1.xpose.msra.mxu0 0.0
        %1648 = vmatprep.subr.mxu0 0.0
        %1649 = vmatpush1.xpose.msra.mxu0 0.0
        %1650 = vmatprep.subr.mxu0 0.0
        %1651 = vmatpush1.xpose.msra.mxu0 0.0
        %1652 = vmatprep.subr.mxu0 0.0
        %1653 = vmatpush1.xpose.msra.mxu0 0.0
        %1654 = vmatprep.subr.mxu0 0.0
        %1655 = vmatpush1.xpose.msra.mxu0 0.0
        %1656 = vmatprep.subr.mxu0 0.0
        %1657 = vmatpush1.xpose.msra.mxu0 0.0
        %1658 = vmatprep.mubr.f32.mxu0 0.0
        %1659 = vmatmul.mubr.f32.gmra.mrb[0].mxu0 %v1583
        %v1660 = vpop.f32.mrb[0].mxu0
        %v1661 = vadd.f32 0.0, %v1660
        %v1662 = vpop.f32.mrb[0].mxu0
        %1663 = vmatprep.mubr.f32.mxu0 0.0
        %1664 = vmatmul.mubr.f32.gmra.mrb[0].mxu0 %v1586
        %v1665 = vpop.f32.mrb[0].mxu0
        %v1666 = vadd.f32 0.0, %v1665
        %v1667 = vpop.f32.mrb[0].mxu0
        %1668 = vdwg.mxu0
        %v1670 = vsel %vm1494, %v840, 0
        %v1673 = vsel %vm1494, %v908, 0
        %v1676 = vsel %vm1494, %v1132, 0
        %v1679 = vsel %vm1494, %v1200, 0
        %1681 = vmatprep.subr.mxu0 0.0
        %1682 = vmatpush1.xpose.msra.mxu0 %v1676
        %1683 = vmatprep.subr.mxu0 0.0
        %1684 = vmatpush1.xpose.msra.mxu0 %v1679
        %1685 = vmatprep.subr.mxu0 0.0
        %1686 = vmatpush1.xpose.msra.mxu0 0.0
        %1687 = vmatprep.subr.mxu0 0.0
        %1688 = vmatpush1.xpose.msra.mxu0 0.0
        %1689 = vmatprep.subr.mxu0 0.0
        %1690 = vmatpush1.xpose.msra.mxu0 0.0
        %1691 = vmatprep.subr.mxu0 0.0
        %1692 = vmatpush1.xpose.msra.mxu0 0.0
        %1693 = vmatprep.subr.mxu0 0.0
        %1694 = vmatpush1.xpose.msra.mxu0 0.0
        %1695 = vmatprep.subr.mxu0 0.0
        %1696 = vmatpush1.xpose.msra.mxu0 0.0
        %1697 = vmatprep.subr.mxu0 0.0
        %1698 = vmatpush1.xpose.msra.mxu0 0.0
        %1699 = vmatprep.subr.mxu0 0.0
        %1700 = vmatpush1.xpose.msra.mxu0 0.0
        %1701 = vmatprep.subr.mxu0 0.0
        %1702 = vmatpush1.xpose.msra.mxu0 0.0
        %1703 = vmatprep.subr.mxu0 0.0
        %1704 = vmatpush1.xpose.msra.mxu0 0.0
        %1705 = vmatprep.subr.mxu0 0.0
        %1706 = vmatpush1.xpose.msra.mxu0 0.0
        %1707 = vmatprep.subr.mxu0 0.0
        %1708 = vmatpush1.xpose.msra.mxu0 0.0
        %1709 = vmatprep.subr.mxu0 0.0
        %1710 = vmatpush1.xpose.msra.mxu0 0.0
        %1711 = vmatprep.subr.mxu0 0.0
        %1712 = vmatpush1.xpose.msra.mxu0 0.0
        %1713 = vmatprep.subr.mxu0 0.0
        %1714 = vmatpush1.xpose.msra.mxu0 0.0
        %1715 = vmatprep.subr.mxu0 0.0
        %1716 = vmatpush1.xpose.msra.mxu0 0.0
        %1717 = vmatprep.subr.mxu0 0.0
        %1718 = vmatpush1.xpose.msra.mxu0 0.0
        %1719 = vmatprep.subr.mxu0 0.0
        %1720 = vmatpush1.xpose.msra.mxu0 0.0
        %1721 = vmatprep.subr.mxu0 0.0
        %1722 = vmatpush1.xpose.msra.mxu0 0.0
        %1723 = vmatprep.subr.mxu0 0.0
        %1724 = vmatpush1.xpose.msra.mxu0 0.0
        %1725 = vmatprep.subr.mxu0 0.0
        %1726 = vmatpush1.xpose.msra.mxu0 0.0
        %1727 = vmatprep.subr.mxu0 0.0
        %1728 = vmatpush1.xpose.msra.mxu0 0.0
        %1729 = vmatprep.subr.mxu0 0.0
        %1730 = vmatpush1.xpose.msra.mxu0 0.0
        %1731 = vmatprep.subr.mxu0 0.0
        %1732 = vmatpush1.xpose.msra.mxu0 0.0
        %1733 = vmatprep.subr.mxu0 0.0
        %1734 = vmatpush1.xpose.msra.mxu0 0.0
        %1735 = vmatprep.subr.mxu0 0.0
        %1736 = vmatpush1.xpose.msra.mxu0 0.0
        %1737 = vmatprep.subr.mxu0 0.0
        %1738 = vmatpush1.xpose.msra.mxu0 0.0
        %1739 = vmatprep.subr.mxu0 0.0
        %1740 = vmatpush1.xpose.msra.mxu0 0.0
        %1741 = vmatprep.subr.mxu0 0.0
        %1742 = vmatpush1.xpose.msra.mxu0 0.0
        %1743 = vmatprep.subr.mxu0 0.0
        %1744 = vmatpush1.xpose.msra.mxu0 0.0
        %1745 = vmatprep.mubr.f32.mxu0 0.0
        %1746 = vmatmul.mubr.f32.gmra.mrb[0].mxu0 %v1670
        %v1747 = vpop.f32.mrb[0].mxu0
        %v1748 = vadd.f32 0.0, %v1747
        %v1749 = vpop.f32.mrb[0].mxu0
        %1750 = vmatprep.mubr.f32.mxu0 0.0
        %1751 = vmatmul.mubr.f32.gmra.mrb[0].mxu0 %v1673
        %v1752 = vpop.f32.mrb[0].mxu0
        %v1753 = vadd.f32 0.0, %v1752
        %v1754 = vpop.f32.mrb[0].mxu0
        %1755 = vdwg.mxu0
        %v1757 = vsel %vm1494, %v841, 0
        %v1760 = vsel %vm1494, %v909, 0
        %v1763 = vsel %vm1494, %v1133, 0
        %v1766 = vsel %vm1494, %v1201, 0
        %1768 = vmatprep.subr.mxu0 0.0
        %1769 = vmatpush1.xpose.msra.mxu0 %v1763
        %1770 = vmatprep.subr.mxu0 0.0
        %1771 = vmatpush1.xpose.msra.mxu0 %v1766
        %1772 = vmatprep.subr.mxu0 0.0
        %1773 = vmatpush1.xpose.msra.mxu0 0.0
        %1774 = vmatprep.subr.mxu0 0.0
        %1775 = vmatpush1.xpose.msra.mxu0 0.0
        %1776 = vmatprep.subr.mxu0 0.0
        %1777 = vmatpush1.xpose.msra.mxu0 0.0
        %1778 = vmatprep.subr.mxu0 0.0
        %1779 = vmatpush1.xpose.msra.mxu0 0.0
        %1780 = vmatprep.subr.mxu0 0.0
        %1781 = vmatpush1.xpose.msra.mxu0 0.0
        %1782 = vmatprep.subr.mxu0 0.0
        %1783 = vmatpush1.xpose.msra.mxu0 0.0
        %1784 = vmatprep.subr.mxu0 0.0
        %1785 = vmatpush1.xpose.msra.mxu0 0.0
        %1786 = vmatprep.subr.mxu0 0.0
        %1787 = vmatpush1.xpose.msra.mxu0 0.0
        %1788 = vmatprep.subr.mxu0 0.0
        %1789 = vmatpush1.xpose.msra.mxu0 0.0
        %1790 = vmatprep.subr.mxu0 0.0
        %1791 = vmatpush1.xpose.msra.mxu0 0.0
        %1792 = vmatprep.subr.mxu0 0.0
        %1793 = vmatpush1.xpose.msra.mxu0 0.0
        %1794 = vmatprep.subr.mxu0 0.0
        %1795 = vmatpush1.xpose.msra.mxu0 0.0
        %1796 = vmatprep.subr.mxu0 0.0
        %1797 = vmatpush1.xpose.msra.mxu0 0.0
        %1798 = vmatprep.subr.mxu0 0.0
        %1799 = vmatpush1.xpose.msra.mxu0 0.0
        %1800 = vmatprep.subr.mxu0 0.0
        %1801 = vmatpush1.xpose.msra.mxu0 0.0
        %1802 = vmatprep.subr.mxu0 0.0
        %1803 = vmatpush1.xpose.msra.mxu0 0.0
        %1804 = vmatprep.subr.mxu0 0.0
        %1805 = vmatpush1.xpose.msra.mxu0 0.0
        %1806 = vmatprep.subr.mxu0 0.0
        %1807 = vmatpush1.xpose.msra.mxu0 0.0
        %1808 = vmatprep.subr.mxu0 0.0
        %1809 = vmatpush1.xpose.msra.mxu0 0.0
        %1810 = vmatprep.subr.mxu0 0.0
        %1811 = vmatpush1.xpose.msra.mxu0 0.0
        %1812 = vmatprep.subr.mxu0 0.0
        %1813 = vmatpush1.xpose.msra.mxu0 0.0
        %1814 = vmatprep.subr.mxu0 0.0
        %1815 = vmatpush1.xpose.msra.mxu0 0.0
        %1816 = vmatprep.subr.mxu0 0.0
        %1817 = vmatpush1.xpose.msra.mxu0 0.0
        %1818 = vmatprep.subr.mxu0 0.0
        %1819 = vmatpush1.xpose.msra.mxu0 0.0
        %1820 = vmatprep.subr.mxu0 0.0
        %1821 = vmatpush1.xpose.msra.mxu0 0.0
        %1822 = vmatprep.subr.mxu0 0.0
        %1823 = vmatpush1.xpose.msra.mxu0 0.0
        %1824 = vmatprep.subr.mxu0 0.0
        %1825 = vmatpush1.xpose.msra.mxu0 0.0
        %1826 = vmatprep.subr.mxu0 0.0
        %1827 = vmatpush1.xpose.msra.mxu0 0.0
        %1828 = vmatprep.subr.mxu0 0.0
        %1829 = vmatpush1.xpose.msra.mxu0 0.0
        %1830 = vmatprep.subr.mxu0 0.0
        %1831 = vmatpush1.xpose.msra.mxu0 0.0
        %1832 = vmatprep.mubr.f32.mxu0 0.0
        %1833 = vmatmul.mubr.f32.gmra.mrb[0].mxu0 %v1757
        %v1834 = vpop.f32.mrb[0].mxu0
        %v1835 = vadd.f32 0.0, %v1834
        %v1836 = vpop.f32.mrb[0].mxu0
        %1837 = vmatprep.mubr.f32.mxu0 0.0
        %1838 = vmatmul.mubr.f32.gmra.mrb[0].mxu0 %v1760
        %v1839 = vpop.f32.mrb[0].mxu0
        %v1840 = vadd.f32 0.0, %v1839
        %v1841 = vpop.f32.mrb[0].mxu0
        %1842 = vdwg.mxu0
        %p1843 = scmp.eq.s32.totalorder %s36, 0
        // Predicated region
        $region61: #{tpu_custom_call.1} parent=39 // pred_check
          %p1844 = pneg %p1843
        $region62: #{tpu_custom_call.1} parent=39 // pred_check_branch
          %1846 = sbr.rel (%p1844) target = $region64
        $region63: #{tpu_custom_call.1} parent=39 // pred_region
          %vm1847 = vcmask 130048
          %1848 = vst.msk [vmem:[#allocation2] sm:$0xff] %vm1847, 0.0
          %1849 = vst.msk [vmem:[#allocation2 + $0x8] sm:$0xff] %vm1847, 0.0
          %1850 = vst.msk [vmem:[#allocation2 + $0x10] sm:$0xff] %vm1847, 0.0
          %1851 = vst.msk [vmem:[#allocation2 + $0x18] sm:$0xff] %vm1847, 0.0
          %1852 = vst.msk [vmem:[#allocation2 + $0x20] sm:$0xff] %vm1847, 0.0
          %1853 = vst.msk [vmem:[#allocation2 + $0x28] sm:$0xff] %vm1847, 0.0
          %1854 = vst.msk [vmem:[#allocation2 + $0x30] sm:$0xff] %vm1847, 0.0
          %1855 = vst.msk [vmem:[#allocation2 + $0x38] sm:$0xff] %vm1847, 0.0
        $region64: #{tpu_custom_call.1} parent=39 // pred_fallthru
          _
        %v1856 = vld [vmem:[#allocation2] sm:$0xff]
        %v1857 = vld [vmem:[#allocation2 + $0x8] sm:$0xff]
        %v1858 = vld [vmem:[#allocation2 + $0x10] sm:$0xff]
        %v1859 = vld [vmem:[#allocation2 + $0x18] sm:$0xff]
        %v1860 = vld [vmem:[#allocation2 + $0x20] sm:$0xff]
        %v1861 = vld [vmem:[#allocation2 + $0x28] sm:$0xff]
        %v1862 = vld [vmem:[#allocation2 + $0x30] sm:$0xff]
        %v1863 = vld [vmem:[#allocation2 + $0x38] sm:$0xff]
        %v1864 = vadd.f32 %v1856, %v1574
        %v1865 = vadd.f32 %v1857, %v1579
        %v1866 = vadd.f32 %v1858, %v1661
        %v1867 = vadd.f32 %v1859, %v1666
        %v1868 = vadd.f32 %v1860, %v1748
        %v1869 = vadd.f32 %v1861, %v1753
        %v1870 = vadd.f32 %v1862, %v1835
        %v1871 = vadd.f32 %v1863, %v1840
        %vm1872 = vcmask 130048
        %1873 = vst.msk [vmem:[#allocation2] sm:$0xff] %vm1872, %v1864
        %1874 = vst.msk [vmem:[#allocation2 + $0x8] sm:$0xff] %vm1872, %v1865
        %1875 = vst.msk [vmem:[#allocation2 + $0x10] sm:$0xff] %vm1872, %v1866
        %1876 = vst.msk [vmem:[#allocation2 + $0x18] sm:$0xff] %vm1872, %v1867
        %1877 = vst.msk [vmem:[#allocation2 + $0x20] sm:$0xff] %vm1872, %v1868
        %1878 = vst.msk [vmem:[#allocation2 + $0x28] sm:$0xff] %vm1872, %v1869
        %1879 = vst.msk [vmem:[#allocation2 + $0x30] sm:$0xff] %vm1872, %v1870
        %1880 = vst.msk [vmem:[#allocation2 + $0x38] sm:$0xff] %vm1872, %v1871
        %s1881 = sadd.s32 %s36, 1
        %s1882 = scvt.s32.f32 %s1881
        %v1883 = vstv %s1882
        %v1884 = vrcp.pop %v1883
        %s1885 = vtos %v1884
        %v1886 = vstv %s1885
        %v1887 = vmul.f32 %v1864, %v1886
        %v1888 = vmul.f32 %v1865, %v1886
        %v1889 = vmul.f32 %v1866, %v1886
        %v1890 = vmul.f32 %v1867, %v1886
        %v1891 = vmul.f32 %v1868, %v1886
        %v1892 = vmul.f32 %v1869, %v1886
        %v1893 = vmul.f32 %v1870, %v1886
        %v1894 = vmul.f32 %v1871, %v1886
        %v1895 = vsel %vm1872, %v1887, -inf
        %1896 = vmax.xlane.f32.xlu0 %v1895
        %v1897 = vpop.xlane.xlu0 %1896
        %v1898 = vsel %vm1872, %v1888, -inf
        %1899 = vmax.xlane.f32.xlu0 %v1898
        %v1900 = vpop.xlane.xlu0 %1899
        %v1901 = vsel %vm1872, %v1889, -inf
        %1902 = vmax.xlane.f32.xlu0 %v1901
        %v1903 = vpop.xlane.xlu0 %1902
        %v1904 = vsel %vm1872, %v1890, -inf
        %1905 = vmax.xlane.f32.xlu0 %v1904
        %v1906 = vpop.xlane.xlu0 %1905
        %v1907 = vsel %vm1872, %v1891, -inf
        %1908 = vmax.xlane.f32.xlu0 %v1907
        %v1909 = vpop.xlane.xlu0 %1908
        %v1910 = vsel %vm1872, %v1892, -inf
        %1911 = vmax.xlane.f32.xlu0 %v1910
        %v1912 = vpop.xlane.xlu0 %1911
        %v1913 = vsel %vm1872, %v1893, -inf
        %1914 = vmax.xlane.f32.xlu0 %v1913
        %v1915 = vpop.xlane.xlu0 %1914
        %v1916 = vsel %vm1872, %v1894, -inf
        %1917 = vmax.xlane.f32.xlu0 %v1916
        %v1918 = vpop.xlane.xlu0 %1917
        %v1919 = vsub.f32 %v1887, %v1897
        %v1920 = vsub.f32 %v1888, %v1900
        %v1921 = vsub.f32 %v1889, %v1903
        %v1922 = vsub.f32 %v1890, %v1906
        %v1923 = vsub.f32 %v1891, %v1909
        %v1924 = vsub.f32 %v1892, %v1912
        %v1925 = vsub.f32 %v1893, %v1915
        %v1926 = vsub.f32 %v1894, %v1918
        %v1927 = vmul.f32 %v1919, 1.442695
        %v1928 = vpow.pop %v1927
        %v1929 = vmul.f32 %v1920, 1.442695
        %v1930 = vpow.pop %v1929
        %v1931 = vmul.f32 %v1921, 1.442695
        %v1932 = vpow.pop %v1931
        %v1933 = vmul.f32 %v1922, 1.442695
        %v1934 = vpow.pop %v1933
        %v1935 = vmul.f32 %v1923, 1.442695
        %v1936 = vpow.pop %v1935
        %v1937 = vmul.f32 %v1924, 1.442695
        %v1938 = vpow.pop %v1937
        %v1939 = vmul.f32 %v1925, 1.442695
        %v1940 = vpow.pop %v1939
        %v1941 = vmul.f32 %v1926, 1.442695
        %v1942 = vpow.pop %v1941
        %v1943 = vsel %vm1872, %v1928, 0.0
        %1944 = vadd.xlane.f32.xlu0 %v1943
        %v1945 = vpop.xlane.xlu0 %1944
        %v1946 = vsel %vm1872, %v1930, 0.0
        %1947 = vadd.xlane.f32.xlu0 %v1946
        %v1948 = vpop.xlane.xlu0 %1947
        %v1949 = vsel %vm1872, %v1932, 0.0
        %1950 = vadd.xlane.f32.xlu0 %v1949
        %v1951 = vpop.xlane.xlu0 %1950
        %v1952 = vsel %vm1872, %v1934, 0.0
        %1953 = vadd.xlane.f32.xlu0 %v1952
        %v1954 = vpop.xlane.xlu0 %1953
        %v1955 = vsel %vm1872, %v1936, 0.0
        %1956 = vadd.xlane.f32.xlu0 %v1955
        %v1957 = vpop.xlane.xlu0 %1956
        %v1958 = vsel %vm1872, %v1938, 0.0
        %1959 = vadd.xlane.f32.xlu0 %v1958
        %v1960 = vpop.xlane.xlu0 %1959
        %v1961 = vsel %vm1872, %v1940, 0.0
        %1962 = vadd.xlane.f32.xlu0 %v1961
        %v1963 = vpop.xlane.xlu0 %1962
        %v1964 = vsel %vm1872, %v1942, 0.0
        %1965 = vadd.xlane.f32.xlu0 %v1964
        %v1966 = vpop.xlane.xlu0 %1965
        %v1967 = vrcp.pop %v1945
        %v1968 = vmul.f32 %v1928, %v1967
        %v1969 = vrcp.pop %v1948
        %v1970 = vmul.f32 %v1930, %v1969
        %v1971 = vrcp.pop %v1951
        %v1972 = vmul.f32 %v1932, %v1971
        %v1973 = vrcp.pop %v1954
        %v1974 = vmul.f32 %v1934, %v1973
        %v1975 = vrcp.pop %v1957
        %v1976 = vmul.f32 %v1936, %v1975
        %v1977 = vrcp.pop %v1960
        %v1978 = vmul.f32 %v1938, %v1977
        %v1979 = vrcp.pop %v1963
        %v1980 = vmul.f32 %v1940, %v1979
        %v1981 = vrcp.pop %v1966
        %v1982 = vmul.f32 %v1942, %v1981
        %1983 = vst.msk [vmem:[%s369] sm:$0xff] %vm1872, %v1968
        %1984 = vst.msk [vmem:[%s369 + $0x8] sm:$0xff] %vm1872, %v1970
        %1985 = vst.msk [vmem:[%s369 + $0x10] sm:$0xff] %vm1872, %v1972
        %1986 = vst.msk [vmem:[%s369 + $0x18] sm:$0xff] %vm1872, %v1974
        %1987 = vst.msk [vmem:[%s369 + $0x20] sm:$0xff] %vm1872, %v1976
        %1988 = vst.msk [vmem:[%s369 + $0x28] sm:$0xff] %vm1872, %v1978
        %1989 = vst.msk [vmem:[%s369 + $0x30] sm:$0xff] %vm1872, %v1980
        %1990 = vst.msk [vmem:[%s369 + $0x38] sm:$0xff] %vm1872, %v1982
        %v1992 = vsel %vm1872, %v1968, 0
        %v1995 = vsel %vm1872, %v1970, 0
        %1997 = vmatprep.subr.mxu0 0.0
        %1998 = vmatpush1.msra.mxu0 %v1422
        %1999 = vmatprep.subr.mxu0 0.0
        %2000 = vmatpush1.msra.mxu0 %v1490
        %2001 = vmatprep.subr.mxu0 0.0
        %2002 = vmatpush1.msra.mxu0 0.0
        %2003 = vmatprep.subr.mxu0 0.0
        %2004 = vmatpush1.msra.mxu0 0.0
        %2005 = vmatprep.subr.mxu0 0.0
        %2006 = vmatpush1.msra.mxu0 0.0
        %2007 = vmatprep.subr.mxu0 0.0
        %2008 = vmatpush1.msra.mxu0 0.0
        %2009 = vmatprep.subr.mxu0 0.0
        %2010 = vmatpush1.msra.mxu0 0.0
        %2011 = vmatprep.subr.mxu0 0.0
        %2012 = vmatpush1.msra.mxu0 0.0
        %2013 = vmatprep.subr.mxu0 0.0
        %2014 = vmatpush1.msra.mxu0 0.0
        %2015 = vmatprep.subr.mxu0 0.0
        %2016 = vmatpush1.msra.mxu0 0.0
        %2017 = vmatprep.subr.mxu0 0.0
        %2018 = vmatpush1.msra.mxu0 0.0
        %2019 = vmatprep.subr.mxu0 0.0
        %2020 = vmatpush1.msra.mxu0 0.0
        %2021 = vmatprep.subr.mxu0 0.0
        %2022 = vmatpush1.msra.mxu0 0.0
        %2023 = vmatprep.subr.mxu0 0.0
        %2024 = vmatpush1.msra.mxu0 0.0
        %2025 = vmatprep.subr.mxu0 0.0
        %2026 = vmatpush1.msra.mxu0 0.0
        %2027 = vmatprep.subr.mxu0 0.0
        %2028 = vmatpush1.msra.mxu0 0.0
        %2029 = vmatprep.subr.mxu0 0.0
        %2030 = vmatpush1.msra.mxu0 0.0
        %2031 = vmatprep.subr.mxu0 0.0
        %2032 = vmatpush1.msra.mxu0 0.0
        %2033 = vmatprep.subr.mxu0 0.0
        %2034 = vmatpush1.msra.mxu0 0.0
        %2035 = vmatprep.subr.mxu0 0.0
        %2036 = vmatpush1.msra.mxu0 0.0
        %2037 = vmatprep.subr.mxu0 0.0
        %2038 = vmatpush1.msra.mxu0 0.0
        %2039 = vmatprep.subr.mxu0 0.0
        %2040 = vmatpush1.msra.mxu0 0.0
        %2041 = vmatprep.subr.mxu0 0.0
        %2042 = vmatpush1.msra.mxu0 0.0
        %2043 = vmatprep.subr.mxu0 0.0
        %2044 = vmatpush1.msra.mxu0 0.0
        %2045 = vmatprep.subr.mxu0 0.0
        %2046 = vmatpush1.msra.mxu0 0.0
        %2047 = vmatprep.subr.mxu0 0.0
        %2048 = vmatpush1.msra.mxu0 0.0
        %2049 = vmatprep.subr.mxu0 0.0
        %2050 = vmatpush1.msra.mxu0 0.0
        %2051 = vmatprep.subr.mxu0 0.0
        %2052 = vmatpush1.msra.mxu0 0.0
        %2053 = vmatprep.subr.mxu0 0.0
        %2054 = vmatpush1.msra.mxu0 0.0
        %2055 = vmatprep.subr.mxu0 0.0
        %2056 = vmatpush1.msra.mxu0 0.0
        %2057 = vmatprep.subr.mxu0 0.0
        %2058 = vmatpush1.msra.mxu0 0.0
        %2059 = vmatprep.subr.mxu0 0.0
        %2060 = vmatpush1.msra.mxu0 0.0
        %2061 = vmatprep.mubr.f32.mxu0 0.0
        %2062 = vmatmul.mubr.f32.gmra.mrb[0].mxu0 %v1992
        %v2063 = vpop.f32.mrb[0].mxu0
        %v2064 = vadd.f32 0.0, %v2063
        %v2065 = vpop.f32.mrb[0].mxu0
        %2066 = vmatprep.mubr.f32.mxu0 0.0
        %2067 = vmatmul.mubr.f32.gmra.mrb[0].mxu0 %v1995
        %v2068 = vpop.f32.mrb[0].mxu0
        %v2069 = vadd.f32 0.0, %v2068
        %v2070 = vpop.f32.mrb[0].mxu0
        %2071 = vdwg.mxu0
        %v2073 = vsel %vm1872, %v1972, 0
        %v2076 = vsel %vm1872, %v1974, 0
        %2078 = vmatprep.subr.mxu0 0.0
        %2079 = vmatpush1.msra.mxu0 %v1423
        %2080 = vmatprep.subr.mxu0 0.0
        %2081 = vmatpush1.msra.mxu0 %v1491
        %2082 = vmatprep.subr.mxu0 0.0
        %2083 = vmatpush1.msra.mxu0 0.0
        %2084 = vmatprep.subr.mxu0 0.0
        %2085 = vmatpush1.msra.mxu0 0.0
        %2086 = vmatprep.subr.mxu0 0.0
        %2087 = vmatpush1.msra.mxu0 0.0
        %2088 = vmatprep.subr.mxu0 0.0
        %2089 = vmatpush1.msra.mxu0 0.0
        %2090 = vmatprep.subr.mxu0 0.0
        %2091 = vmatpush1.msra.mxu0 0.0
        %2092 = vmatprep.subr.mxu0 0.0
        %2093 = vmatpush1.msra.mxu0 0.0
        %2094 = vmatprep.subr.mxu0 0.0
        %2095 = vmatpush1.msra.mxu0 0.0
        %2096 = vmatprep.subr.mxu0 0.0
        %2097 = vmatpush1.msra.mxu0 0.0
        %2098 = vmatprep.subr.mxu0 0.0
        %2099 = vmatpush1.msra.mxu0 0.0
        %2100 = vmatprep.subr.mxu0 0.0
        %2101 = vmatpush1.msra.mxu0 0.0
        %2102 = vmatprep.subr.mxu0 0.0
        %2103 = vmatpush1.msra.mxu0 0.0
        %2104 = vmatprep.subr.mxu0 0.0
        %2105 = vmatpush1.msra.mxu0 0.0
        %2106 = vmatprep.subr.mxu0 0.0
        %2107 = vmatpush1.msra.mxu0 0.0
        %2108 = vmatprep.subr.mxu0 0.0
        %2109 = vmatpush1.msra.mxu0 0.0
        %2110 = vmatprep.subr.mxu0 0.0
        %2111 = vmatpush1.msra.mxu0 0.0
        %2112 = vmatprep.subr.mxu0 0.0
        %2113 = vmatpush1.msra.mxu0 0.0
        %2114 = vmatprep.subr.mxu0 0.0
        %2115 = vmatpush1.msra.mxu0 0.0
        %2116 = vmatprep.subr.mxu0 0.0
        %2117 = vmatpush1.msra.mxu0 0.0
        %2118 = vmatprep.subr.mxu0 0.0
        %2119 = vmatpush1.msra.mxu0 0.0
        %2120 = vmatprep.subr.mxu0 0.0
        %2121 = vmatpush1.msra.mxu0 0.0
        %2122 = vmatprep.subr.mxu0 0.0
        %2123 = vmatpush1.msra.mxu0 0.0
        %2124 = vmatprep.subr.mxu0 0.0
        %2125 = vmatpush1.msra.mxu0 0.0
        %2126 = vmatprep.subr.mxu0 0.0
        %2127 = vmatpush1.msra.mxu0 0.0
        %2128 = vmatprep.subr.mxu0 0.0
        %2129 = vmatpush1.msra.mxu0 0.0
        %2130 = vmatprep.subr.mxu0 0.0
        %2131 = vmatpush1.msra.mxu0 0.0
        %2132 = vmatprep.subr.mxu0 0.0
        %2133 = vmatpush1.msra.mxu0 0.0
        %2134 = vmatprep.subr.mxu0 0.0
        %2135 = vmatpush1.msra.mxu0 0.0
        %2136 = vmatprep.subr.mxu0 0.0
        %2137 = vmatpush1.msra.mxu0 0.0
        %2138 = vmatprep.subr.mxu0 0.0
        %2139 = vmatpush1.msra.mxu0 0.0
        %2140 = vmatprep.subr.mxu0 0.0
        %2141 = vmatpush1.msra.mxu0 0.0
        %2142 = vmatprep.mubr.f32.mxu0 0.0
        %2143 = vmatmul.mubr.f32.gmra.mrb[0].mxu0 %v2073
        %v2144 = vpop.f32.mrb[0].mxu0
        %v2145 = vadd.f32 0.0, %v2144
        %v2146 = vpop.f32.mrb[0].mxu0
        %2147 = vmatprep.mubr.f32.mxu0 0.0
        %2148 = vmatmul.mubr.f32.gmra.mrb[0].mxu0 %v2076
        %v2149 = vpop.f32.mrb[0].mxu0
        %v2150 = vadd.f32 0.0, %v2149
        %v2151 = vpop.f32.mrb[0].mxu0
        %2152 = vdwg.mxu0
        %v2154 = vsel %vm1872, %v1976, 0
        %v2157 = vsel %vm1872, %v1978, 0
        %2159 = vmatprep.subr.mxu0 0.0
        %2160 = vmatpush1.msra.mxu0 %v1424
        %2161 = vmatprep.subr.mxu0 0.0
        %2162 = vmatpush1.msra.mxu0 %v1492
        %2163 = vmatprep.subr.mxu0 0.0
        %2164 = vmatpush1.msra.mxu0 0.0
        %2165 = vmatprep.subr.mxu0 0.0
        %2166 = vmatpush1.msra.mxu0 0.0
        %2167 = vmatprep.subr.mxu0 0.0
        %2168 = vmatpush1.msra.mxu0 0.0
        %2169 = vmatprep.subr.mxu0 0.0
        %2170 = vmatpush1.msra.mxu0 0.0
        %2171 = vmatprep.subr.mxu0 0.0
        %2172 = vmatpush1.msra.mxu0 0.0
        %2173 = vmatprep.subr.mxu0 0.0
        %2174 = vmatpush1.msra.mxu0 0.0
        %2175 = vmatprep.subr.mxu0 0.0
        %2176 = vmatpush1.msra.mxu0 0.0
        %2177 = vmatprep.subr.mxu0 0.0
        %2178 = vmatpush1.msra.mxu0 0.0
        %2179 = vmatprep.subr.mxu0 0.0
        %2180 = vmatpush1.msra.mxu0 0.0
        %2181 = vmatprep.subr.mxu0 0.0
        %2182 = vmatpush1.msra.mxu0 0.0
        %2183 = vmatprep.subr.mxu0 0.0
        %2184 = vmatpush1.msra.mxu0 0.0
        %2185 = vmatprep.subr.mxu0 0.0
        %2186 = vmatpush1.msra.mxu0 0.0
        %2187 = vmatprep.subr.mxu0 0.0
        %2188 = vmatpush1.msra.mxu0 0.0
        %2189 = vmatprep.subr.mxu0 0.0
        %2190 = vmatpush1.msra.mxu0 0.0
        %2191 = vmatprep.subr.mxu0 0.0
        %2192 = vmatpush1.msra.mxu0 0.0
        %2193 = vmatprep.subr.mxu0 0.0
        %2194 = vmatpush1.msra.mxu0 0.0
        %2195 = vmatprep.subr.mxu0 0.0
        %2196 = vmatpush1.msra.mxu0 0.0
        %2197 = vmatprep.subr.mxu0 0.0
        %2198 = vmatpush1.msra.mxu0 0.0
        %2199 = vmatprep.subr.mxu0 0.0
        %2200 = vmatpush1.msra.mxu0 0.0
        %2201 = vmatprep.subr.mxu0 0.0
        %2202 = vmatpush1.msra.mxu0 0.0
        %2203 = vmatprep.subr.mxu0 0.0
        %2204 = vmatpush1.msra.mxu0 0.0
        %2205 = vmatprep.subr.mxu0 0.0
        %2206 = vmatpush1.msra.mxu0 0.0
        %2207 = vmatprep.subr.mxu0 0.0
        %2208 = vmatpush1.msra.mxu0 0.0
        %2209 = vmatprep.subr.mxu0 0.0
        %2210 = vmatpush1.msra.mxu0 0.0
        %2211 = vmatprep.subr.mxu0 0.0
        %2212 = vmatpush1.msra.mxu0 0.0
        %2213 = vmatprep.subr.mxu0 0.0
        %2214 = vmatpush1.msra.mxu0 0.0
        %2215 = vmatprep.subr.mxu0 0.0
        %2216 = vmatpush1.msra.mxu0 0.0
        %2217 = vmatprep.subr.mxu0 0.0
        %2218 = vmatpush1.msra.mxu0 0.0
        %2219 = vmatprep.subr.mxu0 0.0
        %2220 = vmatpush1.msra.mxu0 0.0
        %2221 = vmatprep.subr.mxu0 0.0
        %2222 = vmatpush1.msra.mxu0 0.0
        %2223 = vmatprep.mubr.f32.mxu0 0.0
        %2224 = vmatmul.mubr.f32.gmra.mrb[0].mxu0 %v2154
        %v2225 = vpop.f32.mrb[0].mxu0
        %v2226 = vadd.f32 0.0, %v2225
        %v2227 = vpop.f32.mrb[0].mxu0
        %2228 = vmatprep.mubr.f32.mxu0 0.0
        %2229 = vmatmul.mubr.f32.gmra.mrb[0].mxu0 %v2157
        %v2230 = vpop.f32.mrb[0].mxu0
        %v2231 = vadd.f32 0.0, %v2230
        %v2232 = vpop.f32.mrb[0].mxu0
        %2233 = vdwg.mxu0
        %v2235 = vsel %vm1872, %v1980, 0
        %v2238 = vsel %vm1872, %v1982, 0
        %2240 = vmatprep.subr.mxu0 0.0
        %2241 = vmatpush1.msra.mxu0 %v1425
        %2242 = vmatprep.subr.mxu0 0.0
        %2243 = vmatpush1.msra.mxu0 %v1493
        %2244 = vmatprep.subr.mxu0 0.0
        %2245 = vmatpush1.msra.mxu0 0.0
        %2246 = vmatprep.subr.mxu0 0.0
        %2247 = vmatpush1.msra.mxu0 0.0
        %2248 = vmatprep.subr.mxu0 0.0
        %2249 = vmatpush1.msra.mxu0 0.0
        %2250 = vmatprep.subr.mxu0 0.0
        %2251 = vmatpush1.msra.mxu0 0.0
        %2252 = vmatprep.subr.mxu0 0.0
        %2253 = vmatpush1.msra.mxu0 0.0
        %2254 = vmatprep.subr.mxu0 0.0
        %2255 = vmatpush1.msra.mxu0 0.0
        %2256 = vmatprep.subr.mxu0 0.0
        %2257 = vmatpush1.msra.mxu0 0.0
        %2258 = vmatprep.subr.mxu0 0.0
        %2259 = vmatpush1.msra.mxu0 0.0
        %2260 = vmatprep.subr.mxu0 0.0
        %2261 = vmatpush1.msra.mxu0 0.0
        %2262 = vmatprep.subr.mxu0 0.0
        %2263 = vmatpush1.msra.mxu0 0.0
        %2264 = vmatprep.subr.mxu0 0.0
        %2265 = vmatpush1.msra.mxu0 0.0
        %2266 = vmatprep.subr.mxu0 0.0
        %2267 = vmatpush1.msra.mxu0 0.0
        %2268 = vmatprep.subr.mxu0 0.0
        %2269 = vmatpush1.msra.mxu0 0.0
        %2270 = vmatprep.subr.mxu0 0.0
        %2271 = vmatpush1.msra.mxu0 0.0
        %2272 = vmatprep.subr.mxu0 0.0
        %2273 = vmatpush1.msra.mxu0 0.0
        %2274 = vmatprep.subr.mxu0 0.0
        %2275 = vmatpush1.msra.mxu0 0.0
        %2276 = vmatprep.subr.mxu0 0.0
        %2277 = vmatpush1.msra.mxu0 0.0
        %2278 = vmatprep.subr.mxu0 0.0
        %2279 = vmatpush1.msra.mxu0 0.0
        %2280 = vmatprep.subr.mxu0 0.0
        %2281 = vmatpush1.msra.mxu0 0.0
        %2282 = vmatprep.subr.mxu0 0.0
        %2283 = vmatpush1.msra.mxu0 0.0
        %2284 = vmatprep.subr.mxu0 0.0
        %2285 = vmatpush1.msra.mxu0 0.0
        %2286 = vmatprep.subr.mxu0 0.0
        %2287 = vmatpush1.msra.mxu0 0.0
        %2288 = vmatprep.subr.mxu0 0.0
        %2289 = vmatpush1.msra.mxu0 0.0
        %2290 = vmatprep.subr.mxu0 0.0
        %2291 = vmatpush1.msra.mxu0 0.0
        %2292 = vmatprep.subr.mxu0 0.0
        %2293 = vmatpush1.msra.mxu0 0.0
        %2294 = vmatprep.subr.mxu0 0.0
        %2295 = vmatpush1.msra.mxu0 0.0
        %2296 = vmatprep.subr.mxu0 0.0
        %2297 = vmatpush1.msra.mxu0 0.0
        %2298 = vmatprep.subr.mxu0 0.0
        %2299 = vmatpush1.msra.mxu0 0.0
        %2300 = vmatprep.subr.mxu0 0.0
        %2301 = vmatpush1.msra.mxu0 0.0
        %2302 = vmatprep.subr.mxu0 0.0
        %2303 = vmatpush1.msra.mxu0 0.0
        %2304 = vmatprep.mubr.f32.mxu0 0.0
        %2305 = vmatmul.mubr.f32.gmra.mrb[0].mxu0 %v2235
        %v2306 = vpop.f32.mrb[0].mxu0
        %v2307 = vadd.f32 0.0, %v2306
        %v2308 = vpop.f32.mrb[0].mxu0
        %2309 = vmatprep.mubr.f32.mxu0 0.0
        %2310 = vmatmul.mubr.f32.gmra.mrb[0].mxu0 %v2238
        %v2311 = vpop.f32.mrb[0].mxu0
        %v2312 = vadd.f32 0.0, %v2311
        %v2313 = vpop.f32.mrb[0].mxu0
        %2314 = vdwg.mxu0
        %v2315 = vld [vmem:[#allocation11] sm:$0xff]
        %v2316 = vld [vmem:[#allocation11 + $0x8] sm:$0xff]
        %v2317 = vld [vmem:[#allocation11 + $0x10] sm:$0xff]
        %v2318 = vld [vmem:[#allocation11 + $0x18] sm:$0xff]
        %v2320 = vsel %vm1494, %v2064, 0
        %v2323 = vsel %vm1494, %v2069, 0
        %2325 = vmatprep.subr.mxu0 0.0
        %2326 = vmatpush1.msra.mxu0 %v2315
        %2327 = vmatprep.subr.mxu0 0.0
        %2328 = vmatpush1.msra.mxu0 0.0
        %2329 = vmatprep.subr.mxu0 0.0
        %2330 = vmatpush1.msra.mxu0 0.0
        %2331 = vmatprep.subr.mxu0 0.0
        %2332 = vmatpush1.msra.mxu0 0.0
        %2333 = vmatprep.subr.mxu0 0.0
        %2334 = vmatpush1.msra.mxu0 0.0
        %2335 = vmatprep.subr.mxu0 0.0
        %2336 = vmatpush1.msra.mxu0 0.0
        %2337 = vmatprep.subr.mxu0 0.0
        %2338 = vmatpush1.msra.mxu0 0.0
        %2339 = vmatprep.subr.mxu0 0.0
        %2340 = vmatpush1.msra.mxu0 0.0
        %2341 = vmatprep.subr.mxu0 0.0
        %2342 = vmatpush1.msra.mxu0 0.0
        %2343 = vmatprep.subr.mxu0 0.0
        %2344 = vmatpush1.msra.mxu0 0.0
        %2345 = vmatprep.subr.mxu0 0.0
        %2346 = vmatpush1.msra.mxu0 0.0
        %2347 = vmatprep.subr.mxu0 0.0
        %2348 = vmatpush1.msra.mxu0 0.0
        %2349 = vmatprep.subr.mxu0 0.0
        %2350 = vmatpush1.msra.mxu0 0.0
        %2351 = vmatprep.subr.mxu0 0.0
        %2352 = vmatpush1.msra.mxu0 0.0
        %2353 = vmatprep.subr.mxu0 0.0
        %2354 = vmatpush1.msra.mxu0 0.0
        %2355 = vmatprep.subr.mxu0 0.0
        %2356 = vmatpush1.msra.mxu0 0.0
        %2357 = vmatprep.subr.mxu0 0.0
        %2358 = vmatpush1.msra.mxu0 0.0
        %2359 = vmatprep.subr.mxu0 0.0
        %2360 = vmatpush1.msra.mxu0 0.0
        %2361 = vmatprep.subr.mxu0 0.0
        %2362 = vmatpush1.msra.mxu0 0.0
        %2363 = vmatprep.subr.mxu0 0.0
        %2364 = vmatpush1.msra.mxu0 0.0
        %2365 = vmatprep.subr.mxu0 0.0
        %2366 = vmatpush1.msra.mxu0 0.0
        %2367 = vmatprep.subr.mxu0 0.0
        %2368 = vmatpush1.msra.mxu0 0.0
        %2369 = vmatprep.subr.mxu0 0.0
        %2370 = vmatpush1.msra.mxu0 0.0
        %2371 = vmatprep.subr.mxu0 0.0
        %2372 = vmatpush1.msra.mxu0 0.0
        %2373 = vmatprep.subr.mxu0 0.0
        %2374 = vmatpush1.msra.mxu0 0.0
        %2375 = vmatprep.subr.mxu0 0.0
        %2376 = vmatpush1.msra.mxu0 0.0
        %2377 = vmatprep.subr.mxu0 0.0
        %2378 = vmatpush1.msra.mxu0 0.0
        %2379 = vmatprep.subr.mxu0 0.0
        %2380 = vmatpush1.msra.mxu0 0.0
        %2381 = vmatprep.subr.mxu0 0.0
        %2382 = vmatpush1.msra.mxu0 0.0
        %2383 = vmatprep.subr.mxu0 0.0
        %2384 = vmatpush1.msra.mxu0 0.0
        %2385 = vmatprep.subr.mxu0 0.0
        %2386 = vmatpush1.msra.mxu0 0.0
        %2387 = vmatprep.subr.mxu0 0.0
        %2388 = vmatpush1.msra.mxu0 0.0
        %2389 = vmatprep.mubr.f32.mxu0 0.0
        %2390 = vmatmul.mubr.f32.gmra.mrb[0].mxu0 %v2320
        %v2391 = vpop.f32.mrb[0].mxu0
        %v2392 = vadd.f32 0.0, %v2391
        %v2393 = vpop.f32.mrb[0].mxu0
        %2394 = vmatprep.mubr.f32.mxu0 0.0
        %2395 = vmatmul.mubr.f32.gmra.mrb[0].mxu0 %v2323
        %v2396 = vpop.f32.mrb[0].mxu0
        %v2397 = vadd.f32 0.0, %v2396
        %v2398 = vpop.f32.mrb[0].mxu0
        %2399 = vdwg.mxu0
        %v2401 = vsel %vm1494, %v2145, 0
        %v2404 = vsel %vm1494, %v2150, 0
        %2406 = vmatprep.subr.mxu0 0.0
        %2407 = vmatpush1.msra.mxu0 %v2316
        %2408 = vmatprep.subr.mxu0 0.0
        %2409 = vmatpush1.msra.mxu0 0.0
        %2410 = vmatprep.subr.mxu0 0.0
        %2411 = vmatpush1.msra.mxu0 0.0
        %2412 = vmatprep.subr.mxu0 0.0
        %2413 = vmatpush1.msra.mxu0 0.0
        %2414 = vmatprep.subr.mxu0 0.0
        %2415 = vmatpush1.msra.mxu0 0.0
        %2416 = vmatprep.subr.mxu0 0.0
        %2417 = vmatpush1.msra.mxu0 0.0
        %2418 = vmatprep.subr.mxu0 0.0
        %2419 = vmatpush1.msra.mxu0 0.0
        %2420 = vmatprep.subr.mxu0 0.0
        %2421 = vmatpush1.msra.mxu0 0.0
        %2422 = vmatprep.subr.mxu0 0.0
        %2423 = vmatpush1.msra.mxu0 0.0
        %2424 = vmatprep.subr.mxu0 0.0
        %2425 = vmatpush1.msra.mxu0 0.0
        %2426 = vmatprep.subr.mxu0 0.0
        %2427 = vmatpush1.msra.mxu0 0.0
        %2428 = vmatprep.subr.mxu0 0.0
        %2429 = vmatpush1.msra.mxu0 0.0
        %2430 = vmatprep.subr.mxu0 0.0
        %2431 = vmatpush1.msra.mxu0 0.0
        %2432 = vmatprep.subr.mxu0 0.0
        %2433 = vmatpush1.msra.mxu0 0.0
        %2434 = vmatprep.subr.mxu0 0.0
        %2435 = vmatpush1.msra.mxu0 0.0
        %2436 = vmatprep.subr.mxu0 0.0
        %2437 = vmatpush1.msra.mxu0 0.0
        %2438 = vmatprep.subr.mxu0 0.0
        %2439 = vmatpush1.msra.mxu0 0.0
        %2440 = vmatprep.subr.mxu0 0.0
        %2441 = vmatpush1.msra.mxu0 0.0
        %2442 = vmatprep.subr.mxu0 0.0
        %2443 = vmatpush1.msra.mxu0 0.0
        %2444 = vmatprep.subr.mxu0 0.0
        %2445 = vmatpush1.msra.mxu0 0.0
        %2446 = vmatprep.subr.mxu0 0.0
        %2447 = vmatpush1.msra.mxu0 0.0
        %2448 = vmatprep.subr.mxu0 0.0
        %2449 = vmatpush1.msra.mxu0 0.0
        %2450 = vmatprep.subr.mxu0 0.0
        %2451 = vmatpush1.msra.mxu0 0.0
        %2452 = vmatprep.subr.mxu0 0.0
        %2453 = vmatpush1.msra.mxu0 0.0
        %2454 = vmatprep.subr.mxu0 0.0
        %2455 = vmatpush1.msra.mxu0 0.0
        %2456 = vmatprep.subr.mxu0 0.0
        %2457 = vmatpush1.msra.mxu0 0.0
        %2458 = vmatprep.subr.mxu0 0.0
        %2459 = vmatpush1.msra.mxu0 0.0
        %2460 = vmatprep.subr.mxu0 0.0
        %2461 = vmatpush1.msra.mxu0 0.0
        %2462 = vmatprep.subr.mxu0 0.0
        %2463 = vmatpush1.msra.mxu0 0.0
        %2464 = vmatprep.subr.mxu0 0.0
        %2465 = vmatpush1.msra.mxu0 0.0
        %2466 = vmatprep.subr.mxu0 0.0
        %2467 = vmatpush1.msra.mxu0 0.0
        %2468 = vmatprep.subr.mxu0 0.0
        %2469 = vmatpush1.msra.mxu0 0.0
        %2470 = vmatprep.mubr.f32.mxu0 0.0
        %2471 = vmatmul.mubr.f32.gmra.mrb[0].mxu0 %v2401
        %v2472 = vpop.f32.mrb[0].mxu0
        %v2473 = vadd.f32 0.0, %v2472
        %v2474 = vpop.f32.mrb[0].mxu0
        %2475 = vmatprep.mubr.f32.mxu0 0.0
        %2476 = vmatmul.mubr.f32.gmra.mrb[0].mxu0 %v2404
        %v2477 = vpop.f32.mrb[0].mxu0
        %v2478 = vadd.f32 0.0, %v2477
        %v2479 = vpop.f32.mrb[0].mxu0
        %2480 = vdwg.mxu0
        %v2482 = vsel %vm1494, %v2226, 0
        %v2485 = vsel %vm1494, %v2231, 0
        %2487 = vmatprep.subr.mxu0 0.0
        %2488 = vmatpush1.msra.mxu0 %v2317
        %2489 = vmatprep.subr.mxu0 0.0
        %2490 = vmatpush1.msra.mxu0 0.0
        %2491 = vmatprep.subr.mxu0 0.0
        %2492 = vmatpush1.msra.mxu0 0.0
        %2493 = vmatprep.subr.mxu0 0.0
        %2494 = vmatpush1.msra.mxu0 0.0
        %2495 = vmatprep.subr.mxu0 0.0
        %2496 = vmatpush1.msra.mxu0 0.0
        %2497 = vmatprep.subr.mxu0 0.0
        %2498 = vmatpush1.msra.mxu0 0.0
        %2499 = vmatprep.subr.mxu0 0.0
        %2500 = vmatpush1.msra.mxu0 0.0
        %2501 = vmatprep.subr.mxu0 0.0
        %2502 = vmatpush1.msra.mxu0 0.0
        %2503 = vmatprep.subr.mxu0 0.0
        %2504 = vmatpush1.msra.mxu0 0.0
        %2505 = vmatprep.subr.mxu0 0.0
        %2506 = vmatpush1.msra.mxu0 0.0
        %2507 = vmatprep.subr.mxu0 0.0
        %2508 = vmatpush1.msra.mxu0 0.0
        %2509 = vmatprep.subr.mxu0 0.0
        %2510 = vmatpush1.msra.mxu0 0.0
        %2511 = vmatprep.subr.mxu0 0.0
        %2512 = vmatpush1.msra.mxu0 0.0
        %2513 = vmatprep.subr.mxu0 0.0
        %2514 = vmatpush1.msra.mxu0 0.0
        %2515 = vmatprep.subr.mxu0 0.0
        %2516 = vmatpush1.msra.mxu0 0.0
        %2517 = vmatprep.subr.mxu0 0.0
        %2518 = vmatpush1.msra.mxu0 0.0
        %2519 = vmatprep.subr.mxu0 0.0
        %2520 = vmatpush1.msra.mxu0 0.0
        %2521 = vmatprep.subr.mxu0 0.0
        %2522 = vmatpush1.msra.mxu0 0.0
        %2523 = vmatprep.subr.mxu0 0.0
        %2524 = vmatpush1.msra.mxu0 0.0
        %2525 = vmatprep.subr.mxu0 0.0
        %2526 = vmatpush1.msra.mxu0 0.0
        %2527 = vmatprep.subr.mxu0 0.0
        %2528 = vmatpush1.msra.mxu0 0.0
        %2529 = vmatprep.subr.mxu0 0.0
        %2530 = vmatpush1.msra.mxu0 0.0
        %2531 = vmatprep.subr.mxu0 0.0
        %2532 = vmatpush1.msra.mxu0 0.0
        %2533 = vmatprep.subr.mxu0 0.0
        %2534 = vmatpush1.msra.mxu0 0.0
        %2535 = vmatprep.subr.mxu0 0.0
        %2536 = vmatpush1.msra.mxu0 0.0
        %2537 = vmatprep.subr.mxu0 0.0
        %2538 = vmatpush1.msra.mxu0 0.0
        %2539 = vmatprep.subr.mxu0 0.0
        %2540 = vmatpush1.msra.mxu0 0.0
        %2541 = vmatprep.subr.mxu0 0.0
        %2542 = vmatpush1.msra.mxu0 0.0
        %2543 = vmatprep.subr.mxu0 0.0
        %2544 = vmatpush1.msra.mxu0 0.0
        %2545 = vmatprep.subr.mxu0 0.0
        %2546 = vmatpush1.msra.mxu0 0.0
        %2547 = vmatprep.subr.mxu0 0.0
        %2548 = vmatpush1.msra.mxu0 0.0
        %2549 = vmatprep.subr.mxu0 0.0
        %2550 = vmatpush1.msra.mxu0 0.0
        %2551 = vmatprep.mubr.f32.mxu0 0.0
        %2552 = vmatmul.mubr.f32.gmra.mrb[0].mxu0 %v2482
        %v2553 = vpop.f32.mrb[0].mxu0
        %v2554 = vadd.f32 0.0, %v2553
        %v2555 = vpop.f32.mrb[0].mxu0
        %2556 = vmatprep.mubr.f32.mxu0 0.0
        %2557 = vmatmul.mubr.f32.gmra.mrb[0].mxu0 %v2485
        %v2558 = vpop.f32.mrb[0].mxu0
        %v2559 = vadd.f32 0.0, %v2558
        %v2560 = vpop.f32.mrb[0].mxu0
        %2561 = vdwg.mxu0
        %v2563 = vsel %vm1494, %v2307, 0
        %v2566 = vsel %vm1494, %v2312, 0
        %2568 = vmatprep.subr.mxu0 0.0
        %2569 = vmatpush1.msra.mxu0 %v2318
        %2570 = vmatprep.subr.mxu0 0.0
        %2571 = vmatpush1.msra.mxu0 0.0
        %2572 = vmatprep.subr.mxu0 0.0
        %2573 = vmatpush1.msra.mxu0 0.0
        %2574 = vmatprep.subr.mxu0 0.0
        %2575 = vmatpush1.msra.mxu0 0.0
        %2576 = vmatprep.subr.mxu0 0.0
        %2577 = vmatpush1.msra.mxu0 0.0
        %2578 = vmatprep.subr.mxu0 0.0
        %2579 = vmatpush1.msra.mxu0 0.0
        %2580 = vmatprep.subr.mxu0 0.0
        %2581 = vmatpush1.msra.mxu0 0.0
        %2582 = vmatprep.subr.mxu0 0.0
        %2583 = vmatpush1.msra.mxu0 0.0
        %2584 = vmatprep.subr.mxu0 0.0
        %2585 = vmatpush1.msra.mxu0 0.0
        %2586 = vmatprep.subr.mxu0 0.0
        %2587 = vmatpush1.msra.mxu0 0.0
        %2588 = vmatprep.subr.mxu0 0.0
        %2589 = vmatpush1.msra.mxu0 0.0
        %2590 = vmatprep.subr.mxu0 0.0
        %2591 = vmatpush1.msra.mxu0 0.0
        %2592 = vmatprep.subr.mxu0 0.0
        %2593 = vmatpush1.msra.mxu0 0.0
        %2594 = vmatprep.subr.mxu0 0.0
        %2595 = vmatpush1.msra.mxu0 0.0
        %2596 = vmatprep.subr.mxu0 0.0
        %2597 = vmatpush1.msra.mxu0 0.0
        %2598 = vmatprep.subr.mxu0 0.0
        %2599 = vmatpush1.msra.mxu0 0.0
        %2600 = vmatprep.subr.mxu0 0.0
        %2601 = vmatpush1.msra.mxu0 0.0
        %2602 = vmatprep.subr.mxu0 0.0
        %2603 = vmatpush1.msra.mxu0 0.0
        %2604 = vmatprep.subr.mxu0 0.0
        %2605 = vmatpush1.msra.mxu0 0.0
        %2606 = vmatprep.subr.mxu0 0.0
        %2607 = vmatpush1.msra.mxu0 0.0
        %2608 = vmatprep.subr.mxu0 0.0
        %2609 = vmatpush1.msra.mxu0 0.0
        %2610 = vmatprep.subr.mxu0 0.0
        %2611 = vmatpush1.msra.mxu0 0.0
        %2612 = vmatprep.subr.mxu0 0.0
        %2613 = vmatpush1.msra.mxu0 0.0
        %2614 = vmatprep.subr.mxu0 0.0
        %2615 = vmatpush1.msra.mxu0 0.0
        %2616 = vmatprep.subr.mxu0 0.0
        %2617 = vmatpush1.msra.mxu0 0.0
        %2618 = vmatprep.subr.mxu0 0.0
        %2619 = vmatpush1.msra.mxu0 0.0
        %2620 = vmatprep.subr.mxu0 0.0
        %2621 = vmatpush1.msra.mxu0 0.0
        %2622 = vmatprep.subr.mxu0 0.0
        %2623 = vmatpush1.msra.mxu0 0.0
        %2624 = vmatprep.subr.mxu0 0.0
        %2625 = vmatpush1.msra.mxu0 0.0
        %2626 = vmatprep.subr.mxu0 0.0
        %2627 = vmatpush1.msra.mxu0 0.0
        %2628 = vmatprep.subr.mxu0 0.0
        %2629 = vmatpush1.msra.mxu0 0.0
        %2630 = vmatprep.subr.mxu0 0.0
        %2631 = vmatpush1.msra.mxu0 0.0
        %2632 = vmatprep.mubr.f32.mxu0 0.0
        %2633 = vmatmul.mubr.f32.gmra.mrb[0].mxu0 %v2563
        %v2634 = vpop.f32.mrb[0].mxu0
        %v2635 = vadd.f32 0.0, %v2634
        %v2636 = vpop.f32.mrb[0].mxu0
        %2637 = vmatprep.mubr.f32.mxu0 0.0
        %2638 = vmatmul.mubr.f32.gmra.mrb[0].mxu0 %v2566
        %v2639 = vpop.f32.mrb[0].mxu0
        %v2640 = vadd.f32 0.0, %v2639
        %v2641 = vpop.f32.mrb[0].mxu0
        %2642 = vdwg.mxu0
        %v2643 = vsel %vm378, %v2392, 0.0
        %v2644 = vsel %vm378, %v2473, 0.0
        %v2645 = vadd.f32 %v2643, %v2644
        %v2646 = vsel %vm378, %v2554, 0.0
        %v2647 = vadd.f32 %v2645, %v2646
        %v2648 = vsel %vm378, %v2635, 0.0
        %v2649 = vadd.f32 %v2647, %v2648
        %v2650 = vsel %vm378, %v2397, 0.0
        %v2651 = vsel %vm378, %v2478, 0.0
        %v2652 = vadd.f32 %v2650, %v2651
        %v2653 = vsel %vm378, %v2559, 0.0
        %v2654 = vadd.f32 %v2652, %v2653
        %v2655 = vsel %vm378, %v2640, 0.0
        %v2656 = vadd.f32 %v2654, %v2655
        %2657 = vst.msk [vmem:[%s362] sm:$0xff] %vm378, %v2649
        %2658 = vst.msk [vmem:[%s362 + $0x8] sm:$0xff] %vm378, %v2656
        %s2659 = sand.u32 %s172, 1
        %s2660 = scalar_lea.sflag [#allocation5], %s2659
        %s2661 = sand.u32 %s172, 1
        %s2662 = smul.addr %s2661, 16
        %s2663 = scalar_lea.vmem [#allocation12], %s2662
        %s2664 = sand.u32 %s202, 1
        %s2665 = scalar_lea.sflag [#allocation14], %s2664
        %s2666 = sand.u32 %s202, 1
        %s2667 = smul.addr %s2666, 64
        %s2668 = scalar_lea.vmem [#allocation13], %s2667
        // Predicated region
        $region65: #{tpu_custom_call.1} parent=39 // pred_check
          %p2669 = pneg %p182
        $region66: #{tpu_custom_call.1} parent=39 // pred_check_branch
          %2671 = sbr.rel (%p2669) target = $region68
        $region67: #{tpu_custom_call.1} parent=39 // pred_region
          %s2672 = smul.u32 2, %s35
          %s2674 = ssub.s32 256, 256
          %2675 = vsyncadd %s2660, %s2674
          %s2676 = smul.addr %s34, 2
          %s2677 = sadd.s32 %s2672, %s2676
          %s2678 = smul.addr %s36, 4
          %s2679 = sadd.s32 %s2677, %s2678
          %s2680 = smul.addr %s2679, 128
          %s2681 = scalar_lea.hbm %s5, %s2680
          %s2682 = sshll.u32 %s2663, 4
          %s2683 = int_to_ptr.vmem [resolvable:$true] %s2682
          %2688 = dma.vmem_to_hbm [thread:$0]  %s2683, 256, %s2681, %s2660, 128, 128, 8
        $region68: #{tpu_custom_call.1} parent=39 // pred_fallthru
          _
        // Predicated region
        $region69: #{tpu_custom_call.1} parent=39 // pred_check
          %p2689 = pneg %p212
        $region70: #{tpu_custom_call.1} parent=39 // pred_check_branch
          %2691 = sbr.rel (%p2689) target = $region72
        $region71: #{tpu_custom_call.1} parent=39 // pred_region
          #allocation16 [shape = 'u32[6]{0}', space=smem, size = 0x18, scoped, tag = 'DMA stride descriptor']
          %s2692 = smul.u32 2, %s35
          %s2694 = ssub.s32 1024, 1024
          %2695 = vsyncadd %s2665, %s2694
          %s2696 = smul.addr %s34, 2
          %s2697 = sadd.s32 %s2692, %s2696
          %s2698 = smul.addr %s36, 16
          %s2699 = sadd.s32 %s2697, %s2698
          %s2700 = smul.addr %s2699, 128
          %s2701 = scalar_lea.hbm %s6, %s2700
          %s2703 = sshll.u32 1, 14
          %s2704 = sxor.u32 4294967295, %s2703
          %s2707 = sshll.u32 7, 18
          %s2708 = sxor.u32 4294967295, %s2707
          %s2709 = sand.u32 0, %s2708
          %s2711 = sor.u32 %s2709, 0
          %s2713 = sshll.u32 3, 24
          %s2714 = sxor.u32 4294967295, %s2713
          %s2715 = sand.u32 %s2711, %s2714
          %s2717 = sor.u32 %s2715, 0
          %s2718 = sshll.u32 %s2668, 4
          %s2719 = int_to_ptr.vmem [resolvable:$true] %s2718
          %2725 = sst [smem:[#allocation16]] 256
          %s2726 = scalar_lea.smem [#allocation16], 1
          %2727 = sst [smem:[%s2726]] 512
          %s2728 = scalar_lea.smem [#allocation16], 2
          %2729 = sst [smem:[%s2728]] 2
          %s2730 = scalar_lea.smem [#allocation16], 3
          %2731 = sst [smem:[%s2730]] 128
          %s2732 = scalar_lea.smem [#allocation16], 4
          %2733 = sst [smem:[%s2732]] 128
          %s2734 = scalar_lea.smem [#allocation16], 5
          %2735 = sst [smem:[%s2734]] 8
          %2737 = dma.general %s2719, 1024, %s2701, %s2665, [#allocation15], [#allocation16], %s2717, 0
        $region72: #{tpu_custom_call.1} parent=39 // pred_fallthru
          _
      $region40: #{tpu_custom_call.1} parent=5 // pred_fallthru
        _
      %p2738 = scmp.le.s32.totalorder 2, %s24
      // Predicated region
      $region73: #{tpu_custom_call.1} parent=5 // pred_check
        %p2739 = pneg %p2738
      $region74: #{tpu_custom_call.1} parent=5 // pred_check_branch
        %2741 = sbr.rel (%p2739) target = $region76
      $region75: #{tpu_custom_call.1} parent=5 // pred_region
        %s2742 = ssub.s32 %s24, 2
        // Predicated region
        $region77: #{tpu_custom_call.1} parent=75 // pred_check
          %p2743 = pneg %p188
        $region78: #{tpu_custom_call.1} parent=75 // pred_check_branch
          %2745 = sbr.rel (%p2743) target = $region80
        $region79: #{tpu_custom_call.1} parent=75 // pred_region
          %s2746 = sand.u32 %s173, 1
          %s2747 = scalar_lea.sflag [#allocation5], %s2746
          %s2748 = sand.u32 %s173, 1
          %s2749 = smul.addr %s2748, 16
          %s2750 = scalar_lea.vmem [#allocation12], %s2749
          %2751 = dma.done %s2747, 256
        $region80: #{tpu_custom_call.1} parent=75 // pred_fallthru
          _
        // Predicated region
        $region81: #{tpu_custom_call.1} parent=75 // pred_check
          %p2752 = pneg %p218
        $region82: #{tpu_custom_call.1} parent=75 // pred_check_branch
          %2754 = sbr.rel (%p2752) target = $region84
        $region83: #{tpu_custom_call.1} parent=75 // pred_region
          %s2755 = sand.u32 %s203, 1
          %s2756 = scalar_lea.sflag [#allocation14], %s2755
          %s2757 = sand.u32 %s203, 1
          %s2758 = smul.addr %s2757, 64
          %s2759 = scalar_lea.vmem [#allocation13], %s2758
          %2760 = dma.done %s2756, 1024
        $region84: #{tpu_custom_call.1} parent=75 // pred_fallthru
          _
      $region76: #{tpu_custom_call.1} parent=5 // pred_fallthru
        _
    $region6: #{tpu_custom_call.1} parent=1 // loop_footer
      %s28 = sadd.s32 1, %s24
    $region7: #{tpu_custom_call.1} parent=1 // loop_footer_branch
      %23 = sbr.rel target = $region3
    $region8: #{tpu_custom_call.1} parent=1 // loop_exit
      _
    %2761 = vsyncpa [#allocation4], 1
    %s2762 = scalar_lea.sflag [#allocation4], 1
    %2763 = vsyncpa %s2762, 1
    %2764 = vsyncpa [#allocation7], 1
    %2765 = vsyncpa [#allocation10], 1
    %2766 = vsyncpa [#allocation5], 1
    %s2767 = scalar_lea.sflag [#allocation5], 1
    %2768 = vsyncpa %s2767, 1
    %2769 = vsyncpa [#allocation14], 1
    %s2770 = scalar_lea.sflag [#allocation14], 1
    %2771 = vsyncpa %s2770, 1

</llo_original>
